<compile_context>
chip_gen: v7x
topology: tpu7x:2x2x1
jax: 0.10.0
libtpu: 0.0.40
codegen_flags: <defaults>
</compile_context>

<pallas_src>
import jax
import jax.numpy as jnp
from jax.experimental import pallas as pl
from jax.experimental.pallas import tpu as pltpu

# ----------------------------- "args" / config -----------------------------
B    = 2      # batch
P    = 16     # args.window
m    = 8      # data.m
hidC = 16     # args.hidCNN
hidR = 16     # args.hidRNN
hidS = 8      # args.hidSkip
Ck   = 3      # args.CNN_kernel
SKIP = 2      # args.skip
HW   = 4      # args.highway_window
PT   = (P - Ck) // SKIP          # self.pt
T    = P - Ck + 1                # conv output length
F_IN = hidR + SKIP * hidS        # linear1 input features (skip model)
G1   = 3 * hidR                  # GRU1 gate width
GS   = 3 * hidS                  # GRUskip gate width
GALL = G1 + GS                   # fused projection width

# --------------------- weight-slab layout (bf16, 16-row aligned) -----------
_PERM_R = 0                      # (B*P, B*P) batch-major -> time-major permutation
_CW_R   = 32                     # (Ck*m, hidC) conv weight
_WIH_R  = 64                     # (hidC, GALL) fused GRU input projections
_WHH1_R = 80                     # (hidR, G1)   GRU1 recurrent weight
_WHHS_R = 96                     # (hidS, GS)   GRUskip recurrent weight
_W1_R   = 112                    # (F_IN, m)    linear1 weight
WSLAB_ROWS, WSLAB_COLS = 144, 128

# --------------------- bias-slab layout (f32) ------------------------------
_CB_R, _BIH_R, _BHH1_R, _BHHS_R, _B1_R, _HWB_R = 0, 1, 2, 3, 4, 8
BSLAB_ROWS, BSLAB_COLS = 16, 128


# ----------------------------- fused Pallas kernel --------------------------
def lstnet_kernel(x_ref, w_ref, b_ref, out_ref):
    """Entire LSTNet-skip forward for the whole batch in one kernel invocation.

    x_ref: (B*P, m) f32, rows ordered b*P + p (plain row-major collapse of (B,P,m)).
    w_ref: (144, 128) bf16 weight slab (MXU operands).
    b_ref: (16, 128) f32 bias / highway slab (VPU operands).
    out_ref: (B, m) f32.
    """
    f32, bf16 = jnp.float32, jnp.bfloat16

    # ---- unpack weight slab (bf16 MXU operands, one-time static loads) ----
    perm = w_ref[_PERM_R:_PERM_R + B * P, 0:B * P]        # (32, 32)
    cw   = w_ref[_CW_R:_CW_R + Ck * m, 0:hidC]            # (24, 16)
    wih  = w_ref[_WIH_R:_WIH_R + hidC, 0:GALL]            # (16, 72)
    whh1 = w_ref[_WHH1_R:_WHH1_R + hidR, 0:G1]            # (16, 48)
    whhs = w_ref[_WHHS_R:_WHHS_R + hidS, 0:GS]            # (8, 24)
    w1   = w_ref[_W1_R:_W1_R + F_IN, 0:m]                 # (32, 8)

    # ---- unpack bias slab (f32) ----
    cb   = b_ref[_CB_R:_CB_R + 1, 0:hidC]
    bih  = b_ref[_BIH_R:_BIH_R + 1, 0:GALL]
    bhh1 = b_ref[_BHH1_R:_BHH1_R + 1, 0:G1]
    bhhs = b_ref[_BHHS_R:_BHHS_R + 1, 0:GS]
    b1   = b_ref[_B1_R:_B1_R + 1, 0:m]                    # linear1 bias + highway bias
    hwb  = b_ref[_HWB_R:_HWB_R + HW, 0:m]                 # highway weight broadcast

    # ---- batch-major -> time-major via a tiny MXU permutation matmul ----
    # x_tm[t*B + b, :] = x[b, t, :]
    x_tm = jnp.dot(perm, x_ref[...].astype(bf16), preferred_element_type=f32)  # (P*B, m)

    # ---- conv1 + ReLU: one (T*B, Ck*m) @ (Ck*m, hidC) matmul, time-major rows ----
    xw = jnp.concatenate(
        [x_tm[dt * B: dt * B + T * B, :] for dt in range(Ck)], axis=1).astype(bf16)
    c = jnp.maximum(jnp.dot(xw, cw, preferred_element_type=f32) + cb, 0.0)     # (T*B, hidC)

    # ---- fused GRU1 / GRUskip input projections (one matmul, split once) ----
    gi = jnp.dot(c.astype(bf16), wih, preferred_element_type=f32) + bih        # (T*B, GALL)
    gi1 = gi[:, 0:G1]                                                          # (T*B, 48)
    gis = gi[:, G1:GALL]                                                       # (T*B, 24)

    def gru_step(gi_t, h, whh, bhh, H):
        # PyTorch gate order: [r, z, n]; elementwise math in f32, matmul operands bf16.
        gh = jnp.dot(h.astype(bf16), whh, preferred_element_type=f32) + bhh
        r_g = jax.nn.sigmoid(gi_t[:, 0:H] + gh[:, 0:H])
        z_g = jax.nn.sigmoid(gi_t[:, H:2 * H] + gh[:, H:2 * H])
        n_g = jnp.tanh(gi_t[:, 2 * H:3 * H] + r_g * gh[:, 2 * H:3 * H])
        return (1.0 - z_g) * n_g + z_g * h

    # ---- GRU1 recurrence: T steps, each reads ONE contiguous (B, G1) slice ----
    h1 = jnp.zeros((B, hidR), f32)
    for t in range(T):
        h1 = gru_step(gi1[t * B:(t + 1) * B, :], h1, whh1, bhh1, hidR)

    # ---- skip GRU: PT steps; rows [tt*B .. (tt+SKIP)*B) come out ordered sk*B + b ----
    base = T - PT * SKIP
    hs = jnp.zeros((SKIP * B, hidS), f32)
    for p_ in range(PT):
        r0 = (base + p_ * SKIP) * B
        hs = gru_step(gis[r0:r0 + SKIP * B, :], hs, whhs, bhhs, hidS)
    # s[b] = [hidden(sk=0, b), hidden(sk=1, b)]  ==  PyTorch s.view(B, SKIP*hidS)
    s_flat = jnp.concatenate([hs[sk * B:(sk + 1) * B, :] for sk in range(SKIP)], axis=1)

    # ---- linear1 + highway + sigmoid ----
    r_cat = jnp.concatenate([h1, s_flat], axis=1).astype(bf16)                 # (B, F_IN)
    res = jnp.dot(r_cat, w1, preferred_element_type=f32) + b1

    z = jnp.zeros((B, m), f32)
    for k in range(HW):                                                        # highway AR term
        r0 = (P - HW + k) * B
        z = z + x_tm[r0:r0 + B, :] * hwb[k:k + 1, :]

    out_ref[...] = jax.nn.sigmoid(res + z)


# ----------------------------- wrappers ------------------------------------
def prepare_params(p):
    """One-time layout prep: transposes, fusion, bias folds, slab packing (outside hot path)."""
    f32 = jnp.float32

    # permutation: time-major row t*B+b  <-  batch-major row b*P+t
    tt, bb = jnp.meshgrid(jnp.arange(P), jnp.arange(B), indexing="ij")
    rows = (tt * B + bb).reshape(-1)
    cols = (bb * P + tt).reshape(-1)
    perm = jnp.zeros((B * P, B * P), f32).at[rows, cols].set(1.0)

    wih_all = jnp.concatenate([p["gru1_wih"].T, p["grus_wih"].T], axis=1)      # (hidC, GALL)
    bih_all = jnp.concatenate([p["gru1_bih"], p["grus_bih"]])                  # (GALL,)

    def put(slab, arr, r, c=0):
        return slab.at[r:r + arr.shape[0], c:c + arr.shape[1]].set(arr)

    wslab = jnp.zeros((WSLAB_ROWS, WSLAB_COLS), f32)
    wslab = put(wslab, perm, _PERM_R)
    wslab = put(wslab, p["conv_w"].reshape(Ck * m, hidC), _CW_R)
    wslab = put(wslab, wih_all, _WIH_R)
    wslab = put(wslab, p["gru1_whh"].T, _WHH1_R)
    wslab = put(wslab, p["grus_whh"].T, _WHHS_R)
    wslab = put(wslab, p["lin1_w"].T, _W1_R)
    wslab = wslab.astype(jnp.bfloat16)                                         # MXU operands

    bslab = jnp.zeros((BSLAB_ROWS, BSLAB_COLS), f32)
    bslab = put(bslab, p["conv_b"].reshape(1, hidC), _CB_R)
    bslab = put(bslab, bih_all.reshape(1, GALL), _BIH_R)
    bslab = put(bslab, p["gru1_bhh"].reshape(1, G1), _BHH1_R)
    bslab = put(bslab, p["grus_bhh"].reshape(1, GS), _BHHS_R)
    bslab = put(bslab, (p["lin1_b"] + p["hw_b"][0]).reshape(1, m), _B1_R)      # fold highway bias
    bslab = put(bslab, jnp.tile(p["hw_w"].reshape(HW, 1), (1, m)), _HWB_R)

    return {"wslab": wslab, "bslab": bslab}


def lstnet_forward(x, kp):
    """Single fused pallas_call: 3 input DMAs (x + 2 slabs), everything resident in VMEM."""
    x_flat = x.reshape(B * P, m)            # row-major collapse; no data movement
    vmem = pltpu.MemorySpace.VMEM
    return pl.pallas_call(
        lstnet_kernel,
        out_shape=jax.ShapeDtypeStruct((B, m), jnp.float32),
        in_specs=[pl.BlockSpec(memory_space=vmem),
                  pl.BlockSpec(memory_space=vmem),
                  pl.BlockSpec(memory_space=vmem)],
        out_specs=pl.BlockSpec(memory_space=vmem),
    )(x_flat, kp["wslab"], kp["bslab"])


# ----------------------------- pure-JAX reference ---------------------------
def _gru_ref(x_seq, w_ih, w_hh, b_ih, b_hh):
    H = w_hh.shape[1]

    def step(h, xt):
        gi = xt @ w_ih.T + b_ih
        gh = h @ w_hh.T + b_hh
        r = jax.nn.sigmoid(gi[:, :H] + gh[:, :H])
        z = jax.nn.sigmoid(gi[:, H:2 * H] + gh[:, H:2 * H])
        n = jnp.tanh(gi[:, 2 * H:] + r * gh[:, 2 * H:])
        hn = (1.0 - z) * n + z * h
        return hn, hn

    h0 = jnp.zeros((x_seq.shape[1], H), jnp.float32)
    hlast, hseq = jax.lax.scan(step, h0, x_seq)
    return hseq, hlast


def ref_forward(x, p):
    wins = jnp.stack([x[:, dt:dt + T, :] for dt in range(Ck)], axis=2)   # (B,T,Ck,m)
    c = jnp.einsum("btkj,kjo->bto", wins, p["conv_w"]) + p["conv_b"]
    c = jnp.maximum(c, 0.0)
    c_tbh = jnp.transpose(c, (1, 0, 2))
    _, r = _gru_ref(c_tbh, p["gru1_wih"], p["gru1_whh"], p["gru1_bih"], p["gru1_bhh"])
    c_tail = c_tbh[T - PT * SKIP:]
    s_in = (c_tail.reshape(PT, SKIP, B, hidC).transpose(0, 2, 1, 3)
                  .reshape(PT, B * SKIP, hidC))
    _, s_h = _gru_ref(s_in, p["grus_wih"], p["grus_whh"], p["grus_bih"], p["grus_bhh"])
    r_cat = jnp.concatenate([r, s_h.reshape(B, SKIP * hidS)], axis=1)
    res = r_cat @ p["lin1_w"].T + p["lin1_b"]
    z = (x[:, P - HW:, :].transpose(0, 2, 1).reshape(-1, HW)
         @ p["hw_w"].reshape(HW, 1) + p["hw_b"]).reshape(B, m)
    return jax.nn.sigmoid(res + z)


# ----------------------------- params / main --------------------------------
def init_params(key):
    ks = jax.random.split(key, 14)
    n = lambda k, shape, s=0.2: (s * jax.random.normal(k, shape)).astype(jnp.float32)
    return {
        # conv1 weight stored as (Ck, m, hidC)  (== PyTorch (hidC,1,Ck,m) transposed)
        "conv_w": n(ks[0], (Ck, m, hidC)),
        "conv_b": n(ks[1], (hidC,)),
        # GRU1 (PyTorch layout, gate order r|z|n)
        "gru1_wih": n(ks[2], (3 * hidR, hidC)),
        "gru1_whh": n(ks[3], (3 * hidR, hidR)),
        "gru1_bih": n(ks[4], (3 * hidR,)),
        "gru1_bhh": n(ks[5], (3 * hidR,)),
        # GRUskip
        "grus_wih": n(ks[6], (3 * hidS, hidC)),
        "grus_whh": n(ks[7], (3 * hidS, hidS)),
        "grus_bih": n(ks[8], (3 * hidS,)),
        "grus_bhh": n(ks[9], (3 * hidS,)),
        # linear1
        "lin1_w": n(ks[10], (m, F_IN)),
        "lin1_b": n(ks[11], (m,)),
        # highway
        "hw_w": n(ks[12], (HW,)),
        "hw_b": n(ks[13], (1,)),
    }


if __name__ == "__main__":
    key = jax.random.PRNGKey(0)
    kparam_key, kx = jax.random.split(key)
    params = init_params(kparam_key)
    kernel_params = prepare_params(params)      # one-time layout prep (not in hot path)
    x = jax.random.normal(kx, (B, P, m), dtype=jnp.float32)

    fwd = jax.jit(lstnet_forward)
    out = jax.block_until_ready(fwd(x, kernel_params))

    # f32 reference at scoped 'highest' precision (kernel matmuls run bf16 on the MXU).
    with jax.default_matmul_precision("highest"):
        ref = jax.block_until_ready(jax.jit(ref_forward)(x, params))

    max_err = float(jnp.max(jnp.abs(out - ref)))
    assert out.shape == (B, m), out.shape
    assert max_err < 2e-2, f"mismatch vs reference: {max_err}"

    print("KERNEL_OK")
</pallas_src>

<mosaic_0001>
module attributes {stable_mosaic.version = 11 : i64} {
  func.func @lstnet_kernel(%arg0: memref<32x8xf32, #tpu.memory_space<vmem>>, %arg1: memref<144x128xbf16, #tpu.memory_space<vmem>>, %arg2: memref<16x128xf32, #tpu.memory_space<vmem>>, %arg3: memref<2x8xf32, #tpu.memory_space<vmem>>) attributes {dimension_semantics = [], scalar_prefetch = 0 : i64, scratch_operands = 0 : i64, tpu.core_type = #tpu.core_type<tc>} {
    %c0 = arith.constant 0 : index
    %c0_0 = arith.constant 0 : index
    %0 = vector.load %arg1[%c0, %c0_0] : memref<144x128xbf16, #tpu.memory_space<vmem>>, vector<32x32xbf16>
    %c32 = arith.constant 32 : index
    %c0_1 = arith.constant 0 : index
    %1 = vector.load %arg1[%c32, %c0_1] : memref<144x128xbf16, #tpu.memory_space<vmem>>, vector<24x16xbf16>
    %c64 = arith.constant 64 : index
    %c0_2 = arith.constant 0 : index
    %2 = vector.load %arg1[%c64, %c0_2] : memref<144x128xbf16, #tpu.memory_space<vmem>>, vector<16x72xbf16>
    %c80 = arith.constant 80 : index
    %c0_3 = arith.constant 0 : index
    %3 = vector.load %arg1[%c80, %c0_3] : memref<144x128xbf16, #tpu.memory_space<vmem>>, vector<16x48xbf16>
    %c96 = arith.constant 96 : index
    %c0_4 = arith.constant 0 : index
    %4 = vector.load %arg1[%c96, %c0_4] : memref<144x128xbf16, #tpu.memory_space<vmem>>, vector<8x24xbf16>
    %c112 = arith.constant 112 : index
    %c0_5 = arith.constant 0 : index
    %5 = vector.load %arg1[%c112, %c0_5] : memref<144x128xbf16, #tpu.memory_space<vmem>>, vector<32x8xbf16>
    %c0_6 = arith.constant 0 : index
    %c0_7 = arith.constant 0 : index
    %6 = vector.load %arg2[%c0_6, %c0_7] : memref<16x128xf32, #tpu.memory_space<vmem>>, vector<1x16xf32>
    %c1 = arith.constant 1 : index
    %c0_8 = arith.constant 0 : index
    %7 = vector.load %arg2[%c1, %c0_8] : memref<16x128xf32, #tpu.memory_space<vmem>>, vector<1x72xf32>
    %c2 = arith.constant 2 : index
    %c0_9 = arith.constant 0 : index
    %8 = vector.load %arg2[%c2, %c0_9] : memref<16x128xf32, #tpu.memory_space<vmem>>, vector<1x48xf32>
    %c3 = arith.constant 3 : index
    %c0_10 = arith.constant 0 : index
    %9 = vector.load %arg2[%c3, %c0_10] : memref<16x128xf32, #tpu.memory_space<vmem>>, vector<1x24xf32>
    %c4 = arith.constant 4 : index
    %c0_11 = arith.constant 0 : index
    %10 = vector.load %arg2[%c4, %c0_11] : memref<16x128xf32, #tpu.memory_space<vmem>>, vector<1x8xf32>
    %c8 = arith.constant 8 : index
    %c0_12 = arith.constant 0 : index
    %11 = vector.load %arg2[%c8, %c0_12] : memref<16x128xf32, #tpu.memory_space<vmem>>, vector<4x8xf32>
    %c0_13 = arith.constant 0 : index
    %c0_14 = arith.constant 0 : index
    %12 = vector.load %arg0[%c0_13, %c0_14] : memref<32x8xf32, #tpu.memory_space<vmem>>, vector<32x8xf32>
    %13 = arith.truncf %12 : vector<32x8xf32> to vector<32x8xbf16>
    %cst = arith.constant dense<0.000000e+00> : vector<32x8xf32>
    %14 = tpu.matmul %0, %13, %cst {dimension_numbers = #tpu.dot_dimension_numbers<[1], [0], [0], [1], [0, 0, 1, 1], [], []>} : vector<32x32xbf16>, vector<32x8xbf16>, vector<32x8xf32> -> vector<32x8xf32>
    %15 = vector.extract_strided_slice %14 {offsets = [0, 0], sizes = [28, 8], strides = [1, 1]} : vector<32x8xf32> to vector<28x8xf32>
    %16 = vector.extract_strided_slice %14 {offsets = [2, 0], sizes = [28, 8], strides = [1, 1]} : vector<32x8xf32> to vector<28x8xf32>
    %17 = vector.extract_strided_slice %14 {offsets = [4, 0], sizes = [28, 8], strides = [1, 1]} : vector<32x8xf32> to vector<28x8xf32>
    %18 = tpu.concatenate %15, %16, %17 in 1 : vector<28x8xf32>, vector<28x8xf32>, vector<28x8xf32> -> vector<28x24xf32>
    %19 = arith.truncf %18 : vector<28x24xf32> to vector<28x24xbf16>
    %cst_15 = arith.constant dense<0.000000e+00> : vector<28x16xf32>
    %20 = tpu.matmul %19, %1, %cst_15 {dimension_numbers = #tpu.dot_dimension_numbers<[1], [0], [0], [1], [0, 0, 1, 1], [], []>} : vector<28x24xbf16>, vector<24x16xbf16>, vector<28x16xf32> -> vector<28x16xf32>
    %21 = vector.broadcast %6 : vector<1x16xf32> to vector<28x16xf32>
    %22 = arith.addf %20, %21 : vector<28x16xf32>
    %cst_16 = arith.constant 0.000000e+00 : f32
    %23 = vector.broadcast %cst_16 : f32 to vector<28x16xf32>
    %24 = arith.maximumf %22, %23 : vector<28x16xf32>
    %25 = arith.truncf %24 : vector<28x16xf32> to vector<28x16xbf16>
    %cst_17 = arith.constant dense<0.000000e+00> : vector<28x72xf32>
    %26 = tpu.matmul %25, %2, %cst_17 {dimension_numbers = #tpu.dot_dimension_numbers<[1], [0], [0], [1], [0, 0, 1, 1], [], []>} : vector<28x16xbf16>, vector<16x72xbf16>, vector<28x72xf32> -> vector<28x72xf32>
    %27 = vector.broadcast %7 : vector<1x72xf32> to vector<28x72xf32>
    %28 = arith.addf %26, %27 : vector<28x72xf32>
    %29 = vector.extract_strided_slice %28 {offsets = [0, 0], sizes = [28, 48], strides = [1, 1]} : vector<28x72xf32> to vector<28x48xf32>
    %30 = vector.extract_strided_slice %28 {offsets = [0, 48], sizes = [28, 24], strides = [1, 1]} : vector<28x72xf32> to vector<28x24xf32>
    %cst_18 = arith.constant 0.000000e+00 : f32
    %31 = vector.broadcast %cst_18 : f32 to vector<2x16xf32>
    %32 = vector.extract_strided_slice %29 {offsets = [0, 0], sizes = [2, 48], strides = [1, 1]} : vector<28x48xf32> to vector<2x48xf32>
    %33 = arith.truncf %31 : vector<2x16xf32> to vector<2x16xbf16>
    %cst_19 = arith.constant dense<0.000000e+00> : vector<2x48xf32>
    %34 = tpu.matmul %33, %3, %cst_19 {dimension_numbers = #tpu.dot_dimension_numbers<[1], [0], [0], [1], [0, 0, 1, 1], [], []>} : vector<2x16xbf16>, vector<16x48xbf16>, vector<2x48xf32> -> vector<2x48xf32>
    %35 = vector.broadcast %8 : vector<1x48xf32> to vector<2x48xf32>
    %36 = arith.addf %34, %35 : vector<2x48xf32>
    %37 = vector.extract_strided_slice %32 {offsets = [0, 0], sizes = [2, 16], strides = [1, 1]} : vector<2x48xf32> to vector<2x16xf32>
    %38 = vector.extract_strided_slice %36 {offsets = [0, 0], sizes = [2, 16], strides = [1, 1]} : vector<2x48xf32> to vector<2x16xf32>
    %39 = arith.addf %37, %38 : vector<2x16xf32>
    %40 = arith.negf %39 : vector<2x16xf32>
    %41 = math.exp %40 : vector<2x16xf32>
    %cst_20 = arith.constant 1.000000e+00 : f32
    %42 = vector.broadcast %cst_20 : f32 to vector<2x16xf32>
    %43 = arith.addf %42, %41 : vector<2x16xf32>
    %44 = arith.divf %42, %43 : vector<2x16xf32>
    %45 = vector.extract_strided_slice %32 {offsets = [0, 16], sizes = [2, 16], strides = [1, 1]} : vector<2x48xf32> to vector<2x16xf32>
    %46 = vector.extract_strided_slice %36 {offsets = [0, 16], sizes = [2, 16], strides = [1, 1]} : vector<2x48xf32> to vector<2x16xf32>
    %47 = arith.addf %45, %46 : vector<2x16xf32>
    %48 = arith.negf %47 : vector<2x16xf32>
    %49 = math.exp %48 : vector<2x16xf32>
    %cst_21 = arith.constant 1.000000e+00 : f32
    %50 = vector.broadcast %cst_21 : f32 to vector<2x16xf32>
    %51 = arith.addf %50, %49 : vector<2x16xf32>
    %52 = arith.divf %50, %51 : vector<2x16xf32>
    %53 = vector.extract_strided_slice %32 {offsets = [0, 32], sizes = [2, 16], strides = [1, 1]} : vector<2x48xf32> to vector<2x16xf32>
    %54 = vector.extract_strided_slice %36 {offsets = [0, 32], sizes = [2, 16], strides = [1, 1]} : vector<2x48xf32> to vector<2x16xf32>
    %55 = arith.mulf %44, %54 : vector<2x16xf32>
    %56 = arith.addf %53, %55 : vector<2x16xf32>
    %57 = math.tanh %56 : vector<2x16xf32>
    %cst_22 = arith.constant 1.000000e+00 : f32
    %58 = vector.broadcast %cst_22 : f32 to vector<2x16xf32>
    %59 = arith.subf %58, %52 : vector<2x16xf32>
    %60 = arith.mulf %59, %57 : vector<2x16xf32>
    %61 = arith.mulf %52, %31 : vector<2x16xf32>
    %62 = arith.addf %60, %61 : vector<2x16xf32>
    %63 = vector.extract_strided_slice %29 {offsets = [2, 0], sizes = [2, 48], strides = [1, 1]} : vector<28x48xf32> to vector<2x48xf32>
    %64 = arith.truncf %62 : vector<2x16xf32> to vector<2x16xbf16>
    %cst_23 = arith.constant dense<0.000000e+00> : vector<2x48xf32>
    %65 = tpu.matmul %64, %3, %cst_23 {dimension_numbers = #tpu.dot_dimension_numbers<[1], [0], [0], [1], [0, 0, 1, 1], [], []>} : vector<2x16xbf16>, vector<16x48xbf16>, vector<2x48xf32> -> vector<2x48xf32>
    %66 = vector.broadcast %8 : vector<1x48xf32> to vector<2x48xf32>
    %67 = arith.addf %65, %66 : vector<2x48xf32>
    %68 = vector.extract_strided_slice %63 {offsets = [0, 0], sizes = [2, 16], strides = [1, 1]} : vector<2x48xf32> to vector<2x16xf32>
    %69 = vector.extract_strided_slice %67 {offsets = [0, 0], sizes = [2, 16], strides = [1, 1]} : vector<2x48xf32> to vector<2x16xf32>
    %70 = arith.addf %68, %69 : vector<2x16xf32>
    %71 = arith.negf %70 : vector<2x16xf32>
    %72 = math.exp %71 : vector<2x16xf32>
    %cst_24 = arith.constant 1.000000e+00 : f32
    %73 = vector.broadcast %cst_24 : f32 to vector<2x16xf32>
    %74 = arith.addf %73, %72 : vector<2x16xf32>
    %75 = arith.divf %73, %74 : vector<2x16xf32>
    %76 = vector.extract_strided_slice %63 {offsets = [0, 16], sizes = [2, 16], strides = [1, 1]} : vector<2x48xf32> to vector<2x16xf32>
    %77 = vector.extract_strided_slice %67 {offsets = [0, 16], sizes = [2, 16], strides = [1, 1]} : vector<2x48xf32> to vector<2x16xf32>
    %78 = arith.addf %76, %77 : vector<2x16xf32>
    %79 = arith.negf %78 : vector<2x16xf32>
    %80 = math.exp %79 : vector<2x16xf32>
    %cst_25 = arith.constant 1.000000e+00 : f32
    %81 = vector.broadcast %cst_25 : f32 to vector<2x16xf32>
    %82 = arith.addf %81, %80 : vector<2x16xf32>
    %83 = arith.divf %81, %82 : vector<2x16xf32>
    %84 = vector.extract_strided_slice %63 {offsets = [0, 32], sizes = [2, 16], strides = [1, 1]} : vector<2x48xf32> to vector<2x16xf32>
    %85 = vector.extract_strided_slice %67 {offsets = [0, 32], sizes = [2, 16], strides = [1, 1]} : vector<2x48xf32> to vector<2x16xf32>
    %86 = arith.mulf %75, %85 : vector<2x16xf32>
    %87 = arith.addf %84, %86 : vector<2x16xf32>
    %88 = math.tanh %87 : vector<2x16xf32>
    %cst_26 = arith.constant 1.000000e+00 : f32
    %89 = vector.broadcast %cst_26 : f32 to vector<2x16xf32>
    %90 = arith.subf %89, %83 : vector<2x16xf32>
    %91 = arith.mulf %90, %88 : vector<2x16xf32>
    %92 = arith.mulf %83, %62 : vector<2x16xf32>
    %93 = arith.addf %91, %92 : vector<2x16xf32>
    %94 = vector.extract_strided_slice %29 {offsets = [4, 0], sizes = [2, 48], strides = [1, 1]} : vector<28x48xf32> to vector<2x48xf32>
    %95 = arith.truncf %93 : vector<2x16xf32> to vector<2x16xbf16>
    %cst_27 = arith.constant dense<0.000000e+00> : vector<2x48xf32>
    %96 = tpu.matmul %95, %3, %cst_27 {dimension_numbers = #tpu.dot_dimension_numbers<[1], [0], [0], [1], [0, 0, 1, 1], [], []>} : vector<2x16xbf16>, vector<16x48xbf16>, vector<2x48xf32> -> vector<2x48xf32>
    %97 = vector.broadcast %8 : vector<1x48xf32> to vector<2x48xf32>
    %98 = arith.addf %96, %97 : vector<2x48xf32>
    %99 = vector.extract_strided_slice %94 {offsets = [0, 0], sizes = [2, 16], strides = [1, 1]} : vector<2x48xf32> to vector<2x16xf32>
    %100 = vector.extract_strided_slice %98 {offsets = [0, 0], sizes = [2, 16], strides = [1, 1]} : vector<2x48xf32> to vector<2x16xf32>
    %101 = arith.addf %99, %100 : vector<2x16xf32>
    %102 = arith.negf %101 : vector<2x16xf32>
    %103 = math.exp %102 : vector<2x16xf32>
    %cst_28 = arith.constant 1.000000e+00 : f32
    %104 = vector.broadcast %cst_28 : f32 to vector<2x16xf32>
    %105 = arith.addf %104, %103 : vector<2x16xf32>
    %106 = arith.divf %104, %105 : vector<2x16xf32>
    %107 = vector.extract_strided_slice %94 {offsets = [0, 16], sizes = [2, 16], strides = [1, 1]} : vector<2x48xf32> to vector<2x16xf32>
    %108 = vector.extract_strided_slice %98 {offsets = [0, 16], sizes = [2, 16], strides = [1, 1]} : vector<2x48xf32> to vector<2x16xf32>
    %109 = arith.addf %107, %108 : vector<2x16xf32>
    %110 = arith.negf %109 : vector<2x16xf32>
    %111 = math.exp %110 : vector<2x16xf32>
    %cst_29 = arith.constant 1.000000e+00 : f32
    %112 = vector.broadcast %cst_29 : f32 to vector<2x16xf32>
    %113 = arith.addf %112, %111 : vector<2x16xf32>
    %114 = arith.divf %112, %113 : vector<2x16xf32>
    %115 = vector.extract_strided_slice %94 {offsets = [0, 32], sizes = [2, 16], strides = [1, 1]} : vector<2x48xf32> to vector<2x16xf32>
    %116 = vector.extract_strided_slice %98 {offsets = [0, 32], sizes = [2, 16], strides = [1, 1]} : vector<2x48xf32> to vector<2x16xf32>
    %117 = arith.mulf %106, %116 : vector<2x16xf32>
    %118 = arith.addf %115, %117 : vector<2x16xf32>
    %119 = math.tanh %118 : vector<2x16xf32>
    %cst_30 = arith.constant 1.000000e+00 : f32
    %120 = vector.broadcast %cst_30 : f32 to vector<2x16xf32>
    %121 = arith.subf %120, %114 : vector<2x16xf32>
    %122 = arith.mulf %121, %119 : vector<2x16xf32>
    %123 = arith.mulf %114, %93 : vector<2x16xf32>
    %124 = arith.addf %122, %123 : vector<2x16xf32>
    %125 = vector.extract_strided_slice %29 {offsets = [6, 0], sizes = [2, 48], strides = [1, 1]} : vector<28x48xf32> to vector<2x48xf32>
    %126 = arith.truncf %124 : vector<2x16xf32> to vector<2x16xbf16>
    %cst_31 = arith.constant dense<0.000000e+00> : vector<2x48xf32>
    %127 = tpu.matmul %126, %3, %cst_31 {dimension_numbers = #tpu.dot_dimension_numbers<[1], [0], [0], [1], [0, 0, 1, 1], [], []>} : vector<2x16xbf16>, vector<16x48xbf16>, vector<2x48xf32> -> vector<2x48xf32>
    %128 = vector.broadcast %8 : vector<1x48xf32> to vector<2x48xf32>
    %129 = arith.addf %127, %128 : vector<2x48xf32>
    %130 = vector.extract_strided_slice %125 {offsets = [0, 0], sizes = [2, 16], strides = [1, 1]} : vector<2x48xf32> to vector<2x16xf32>
    %131 = vector.extract_strided_slice %129 {offsets = [0, 0], sizes = [2, 16], strides = [1, 1]} : vector<2x48xf32> to vector<2x16xf32>
    %132 = arith.addf %130, %131 : vector<2x16xf32>
    %133 = arith.negf %132 : vector<2x16xf32>
    %134 = math.exp %133 : vector<2x16xf32>
    %cst_32 = arith.constant 1.000000e+00 : f32
    %135 = vector.broadcast %cst_32 : f32 to vector<2x16xf32>
    %136 = arith.addf %135, %134 : vector<2x16xf32>
    %137 = arith.divf %135, %136 : vector<2x16xf32>
    %138 = vector.extract_strided_slice %125 {offsets = [0, 16], sizes = [2, 16], strides = [1, 1]} : vector<2x48xf32> to vector<2x16xf32>
    %139 = vector.extract_strided_slice %129 {offsets = [0, 16], sizes = [2, 16], strides = [1, 1]} : vector<2x48xf32> to vector<2x16xf32>
    %140 = arith.addf %138, %139 : vector<2x16xf32>
    %141 = arith.negf %140 : vector<2x16xf32>
    %142 = math.exp %141 : vector<2x16xf32>
    %cst_33 = arith.constant 1.000000e+00 : f32
    %143 = vector.broadcast %cst_33 : f32 to vector<2x16xf32>
    %144 = arith.addf %143, %142 : vector<2x16xf32>
    %145 = arith.divf %143, %144 : vector<2x16xf32>
    %146 = vector.extract_strided_slice %125 {offsets = [0, 32], sizes = [2, 16], strides = [1, 1]} : vector<2x48xf32> to vector<2x16xf32>
    %147 = vector.extract_strided_slice %129 {offsets = [0, 32], sizes = [2, 16], strides = [1, 1]} : vector<2x48xf32> to vector<2x16xf32>
    %148 = arith.mulf %137, %147 : vector<2x16xf32>
    %149 = arith.addf %146, %148 : vector<2x16xf32>
    %150 = math.tanh %149 : vector<2x16xf32>
    %cst_34 = arith.constant 1.000000e+00 : f32
    %151 = vector.broadcast %cst_34 : f32 to vector<2x16xf32>
    %152 = arith.subf %151, %145 : vector<2x16xf32>
    %153 = arith.mulf %152, %150 : vector<2x16xf32>
    %154 = arith.mulf %145, %124 : vector<2x16xf32>
    %155 = arith.addf %153, %154 : vector<2x16xf32>
    %156 = vector.extract_strided_slice %29 {offsets = [8, 0], sizes = [2, 48], strides = [1, 1]} : vector<28x48xf32> to vector<2x48xf32>
    %157 = arith.truncf %155 : vector<2x16xf32> to vector<2x16xbf16>
    %cst_35 = arith.constant dense<0.000000e+00> : vector<2x48xf32>
    %158 = tpu.matmul %157, %3, %cst_35 {dimension_numbers = #tpu.dot_dimension_numbers<[1], [0], [0], [1], [0, 0, 1, 1], [], []>} : vector<2x16xbf16>, vector<16x48xbf16>, vector<2x48xf32> -> vector<2x48xf32>
    %159 = vector.broadcast %8 : vector<1x48xf32> to vector<2x48xf32>
    %160 = arith.addf %158, %159 : vector<2x48xf32>
    %161 = vector.extract_strided_slice %156 {offsets = [0, 0], sizes = [2, 16], strides = [1, 1]} : vector<2x48xf32> to vector<2x16xf32>
    %162 = vector.extract_strided_slice %160 {offsets = [0, 0], sizes = [2, 16], strides = [1, 1]} : vector<2x48xf32> to vector<2x16xf32>
    %163 = arith.addf %161, %162 : vector<2x16xf32>
    %164 = arith.negf %163 : vector<2x16xf32>
    %165 = math.exp %164 : vector<2x16xf32>
    %cst_36 = arith.constant 1.000000e+00 : f32
    %166 = vector.broadcast %cst_36 : f32 to vector<2x16xf32>
    %167 = arith.addf %166, %165 : vector<2x16xf32>
    %168 = arith.divf %166, %167 : vector<2x16xf32>
    %169 = vector.extract_strided_slice %156 {offsets = [0, 16], sizes = [2, 16], strides = [1, 1]} : vector<2x48xf32> to vector<2x16xf32>
    %170 = vector.extract_strided_slice %160 {offsets = [0, 16], sizes = [2, 16], strides = [1, 1]} : vector<2x48xf32> to vector<2x16xf32>
    %171 = arith.addf %169, %170 : vector<2x16xf32>
    %172 = arith.negf %171 : vector<2x16xf32>
    %173 = math.exp %172 : vector<2x16xf32>
    %cst_37 = arith.constant 1.000000e+00 : f32
    %174 = vector.broadcast %cst_37 : f32 to vector<2x16xf32>
    %175 = arith.addf %174, %173 : vector<2x16xf32>
    %176 = arith.divf %174, %175 : vector<2x16xf32>
    %177 = vector.extract_strided_slice %156 {offsets = [0, 32], sizes = [2, 16], strides = [1, 1]} : vector<2x48xf32> to vector<2x16xf32>
    %178 = vector.extract_strided_slice %160 {offsets = [0, 32], sizes = [2, 16], strides = [1, 1]} : vector<2x48xf32> to vector<2x16xf32>
    %179 = arith.mulf %168, %178 : vector<2x16xf32>
    %180 = arith.addf %177, %179 : vector<2x16xf32>
    %181 = math.tanh %180 : vector<2x16xf32>
    %cst_38 = arith.constant 1.000000e+00 : f32
    %182 = vector.broadcast %cst_38 : f32 to vector<2x16xf32>
    %183 = arith.subf %182, %176 : vector<2x16xf32>
    %184 = arith.mulf %183, %181 : vector<2x16xf32>
    %185 = arith.mulf %176, %155 : vector<2x16xf32>
    %186 = arith.addf %184, %185 : vector<2x16xf32>
    %187 = vector.extract_strided_slice %29 {offsets = [10, 0], sizes = [2, 48], strides = [1, 1]} : vector<28x48xf32> to vector<2x48xf32>
    %188 = arith.truncf %186 : vector<2x16xf32> to vector<2x16xbf16>
    %cst_39 = arith.constant dense<0.000000e+00> : vector<2x48xf32>
    %189 = tpu.matmul %188, %3, %cst_39 {dimension_numbers = #tpu.dot_dimension_numbers<[1], [0], [0], [1], [0, 0, 1, 1], [], []>} : vector<2x16xbf16>, vector<16x48xbf16>, vector<2x48xf32> -> vector<2x48xf32>
    %190 = vector.broadcast %8 : vector<1x48xf32> to vector<2x48xf32>
    %191 = arith.addf %189, %190 : vector<2x48xf32>
    %192 = vector.extract_strided_slice %187 {offsets = [0, 0], sizes = [2, 16], strides = [1, 1]} : vector<2x48xf32> to vector<2x16xf32>
    %193 = vector.extract_strided_slice %191 {offsets = [0, 0], sizes = [2, 16], strides = [1, 1]} : vector<2x48xf32> to vector<2x16xf32>
    %194 = arith.addf %192, %193 : vector<2x16xf32>
    %195 = arith.negf %194 : vector<2x16xf32>
    %196 = math.exp %195 : vector<2x16xf32>
    %cst_40 = arith.constant 1.000000e+00 : f32
    %197 = vector.broadcast %cst_40 : f32 to vector<2x16xf32>
    %198 = arith.addf %197, %196 : vector<2x16xf32>
    %199 = arith.divf %197, %198 : vector<2x16xf32>
    %200 = vector.extract_strided_slice %187 {offsets = [0, 16], sizes = [2, 16], strides = [1, 1]} : vector<2x48xf32> to vector<2x16xf32>
    %201 = vector.extract_strided_slice %191 {offsets = [0, 16], sizes = [2, 16], strides = [1, 1]} : vector<2x48xf32> to vector<2x16xf32>
    %202 = arith.addf %200, %201 : vector<2x16xf32>
    %203 = arith.negf %202 : vector<2x16xf32>
    %204 = math.exp %203 : vector<2x16xf32>
    %cst_41 = arith.constant 1.000000e+00 : f32
    %205 = vector.broadcast %cst_41 : f32 to vector<2x16xf32>
    %206 = arith.addf %205, %204 : vector<2x16xf32>
    %207 = arith.divf %205, %206 : vector<2x16xf32>
    %208 = vector.extract_strided_slice %187 {offsets = [0, 32], sizes = [2, 16], strides = [1, 1]} : vector<2x48xf32> to vector<2x16xf32>
    %209 = vector.extract_strided_slice %191 {offsets = [0, 32], sizes = [2, 16], strides = [1, 1]} : vector<2x48xf32> to vector<2x16xf32>
    %210 = arith.mulf %199, %209 : vector<2x16xf32>
    %211 = arith.addf %208, %210 : vector<2x16xf32>
    %212 = math.tanh %211 : vector<2x16xf32>
    %cst_42 = arith.constant 1.000000e+00 : f32
    %213 = vector.broadcast %cst_42 : f32 to vector<2x16xf32>
    %214 = arith.subf %213, %207 : vector<2x16xf32>
    %215 = arith.mulf %214, %212 : vector<2x16xf32>
    %216 = arith.mulf %207, %186 : vector<2x16xf32>
    %217 = arith.addf %215, %216 : vector<2x16xf32>
    %218 = vector.extract_strided_slice %29 {offsets = [12, 0], sizes = [2, 48], strides = [1, 1]} : vector<28x48xf32> to vector<2x48xf32>
    %219 = arith.truncf %217 : vector<2x16xf32> to vector<2x16xbf16>
    %cst_43 = arith.constant dense<0.000000e+00> : vector<2x48xf32>
    %220 = tpu.matmul %219, %3, %cst_43 {dimension_numbers = #tpu.dot_dimension_numbers<[1], [0], [0], [1], [0, 0, 1, 1], [], []>} : vector<2x16xbf16>, vector<16x48xbf16>, vector<2x48xf32> -> vector<2x48xf32>
    %221 = vector.broadcast %8 : vector<1x48xf32> to vector<2x48xf32>
    %222 = arith.addf %220, %221 : vector<2x48xf32>
    %223 = vector.extract_strided_slice %218 {offsets = [0, 0], sizes = [2, 16], strides = [1, 1]} : vector<2x48xf32> to vector<2x16xf32>
    %224 = vector.extract_strided_slice %222 {offsets = [0, 0], sizes = [2, 16], strides = [1, 1]} : vector<2x48xf32> to vector<2x16xf32>
    %225 = arith.addf %223, %224 : vector<2x16xf32>
    %226 = arith.negf %225 : vector<2x16xf32>
    %227 = math.exp %226 : vector<2x16xf32>
    %cst_44 = arith.constant 1.000000e+00 : f32
    %228 = vector.broadcast %cst_44 : f32 to vector<2x16xf32>
    %229 = arith.addf %228, %227 : vector<2x16xf32>
    %230 = arith.divf %228, %229 : vector<2x16xf32>
    %231 = vector.extract_strided_slice %218 {offsets = [0, 16], sizes = [2, 16], strides = [1, 1]} : vector<2x48xf32> to vector<2x16xf32>
    %232 = vector.extract_strided_slice %222 {offsets = [0, 16], sizes = [2, 16], strides = [1, 1]} : vector<2x48xf32> to vector<2x16xf32>
    %233 = arith.addf %231, %232 : vector<2x16xf32>
    %234 = arith.negf %233 : vector<2x16xf32>
    %235 = math.exp %234 : vector<2x16xf32>
    %cst_45 = arith.constant 1.000000e+00 : f32
    %236 = vector.broadcast %cst_45 : f32 to vector<2x16xf32>
    %237 = arith.addf %236, %235 : vector<2x16xf32>
    %238 = arith.divf %236, %237 : vector<2x16xf32>
    %239 = vector.extract_strided_slice %218 {offsets = [0, 32], sizes = [2, 16], strides = [1, 1]} : vector<2x48xf32> to vector<2x16xf32>
    %240 = vector.extract_strided_slice %222 {offsets = [0, 32], sizes = [2, 16], strides = [1, 1]} : vector<2x48xf32> to vector<2x16xf32>
    %241 = arith.mulf %230, %240 : vector<2x16xf32>
    %242 = arith.addf %239, %241 : vector<2x16xf32>
    %243 = math.tanh %242 : vector<2x16xf32>
    %cst_46 = arith.constant 1.000000e+00 : f32
    %244 = vector.broadcast %cst_46 : f32 to vector<2x16xf32>
    %245 = arith.subf %244, %238 : vector<2x16xf32>
    %246 = arith.mulf %245, %243 : vector<2x16xf32>
    %247 = arith.mulf %238, %217 : vector<2x16xf32>
    %248 = arith.addf %246, %247 : vector<2x16xf32>
    %249 = vector.extract_strided_slice %29 {offsets = [14, 0], sizes = [2, 48], strides = [1, 1]} : vector<28x48xf32> to vector<2x48xf32>
    %250 = arith.truncf %248 : vector<2x16xf32> to vector<2x16xbf16>
    %cst_47 = arith.constant dense<0.000000e+00> : vector<2x48xf32>
    %251 = tpu.matmul %250, %3, %cst_47 {dimension_numbers = #tpu.dot_dimension_numbers<[1], [0], [0], [1], [0, 0, 1, 1], [], []>} : vector<2x16xbf16>, vector<16x48xbf16>, vector<2x48xf32> -> vector<2x48xf32>
    %252 = vector.broadcast %8 : vector<1x48xf32> to vector<2x48xf32>
    %253 = arith.addf %251, %252 : vector<2x48xf32>
    %254 = vector.extract_strided_slice %249 {offsets = [0, 0], sizes = [2, 16], strides = [1, 1]} : vector<2x48xf32> to vector<2x16xf32>
    %255 = vector.extract_strided_slice %253 {offsets = [0, 0], sizes = [2, 16], strides = [1, 1]} : vector<2x48xf32> to vector<2x16xf32>
    %256 = arith.addf %254, %255 : vector<2x16xf32>
    %257 = arith.negf %256 : vector<2x16xf32>
    %258 = math.exp %257 : vector<2x16xf32>
    %cst_48 = arith.constant 1.000000e+00 : f32
    %259 = vector.broadcast %cst_48 : f32 to vector<2x16xf32>
    %260 = arith.addf %259, %258 : vector<2x16xf32>
    %261 = arith.divf %259, %260 : vector<2x16xf32>
    %262 = vector.extract_strided_slice %249 {offsets = [0, 16], sizes = [2, 16], strides = [1, 1]} : vector<2x48xf32> to vector<2x16xf32>
    %263 = vector.extract_strided_slice %253 {offsets = [0, 16], sizes = [2, 16], strides = [1, 1]} : vector<2x48xf32> to vector<2x16xf32>
    %264 = arith.addf %262, %263 : vector<2x16xf32>
    %265 = arith.negf %264 : vector<2x16xf32>
    %266 = math.exp %265 : vector<2x16xf32>
    %cst_49 = arith.constant 1.000000e+00 : f32
    %267 = vector.broadcast %cst_49 : f32 to vector<2x16xf32>
    %268 = arith.addf %267, %266 : vector<2x16xf32>
    %269 = arith.divf %267, %268 : vector<2x16xf32>
    %270 = vector.extract_strided_slice %249 {offsets = [0, 32], sizes = [2, 16], strides = [1, 1]} : vector<2x48xf32> to vector<2x16xf32>
    %271 = vector.extract_strided_slice %253 {offsets = [0, 32], sizes = [2, 16], strides = [1, 1]} : vector<2x48xf32> to vector<2x16xf32>
    %272 = arith.mulf %261, %271 : vector<2x16xf32>
    %273 = arith.addf %270, %272 : vector<2x16xf32>
    %274 = math.tanh %273 : vector<2x16xf32>
    %cst_50 = arith.constant 1.000000e+00 : f32
    %275 = vector.broadcast %cst_50 : f32 to vector<2x16xf32>
    %276 = arith.subf %275, %269 : vector<2x16xf32>
    %277 = arith.mulf %276, %274 : vector<2x16xf32>
    %278 = arith.mulf %269, %248 : vector<2x16xf32>
    %279 = arith.addf %277, %278 : vector<2x16xf32>
    %280 = vector.extract_strided_slice %29 {offsets = [16, 0], sizes = [2, 48], strides = [1, 1]} : vector<28x48xf32> to vector<2x48xf32>
    %281 = arith.truncf %279 : vector<2x16xf32> to vector<2x16xbf16>
    %cst_51 = arith.constant dense<0.000000e+00> : vector<2x48xf32>
    %282 = tpu.matmul %281, %3, %cst_51 {dimension_numbers = #tpu.dot_dimension_numbers<[1], [0], [0], [1], [0, 0, 1, 1], [], []>} : vector<2x16xbf16>, vector<16x48xbf16>, vector<2x48xf32> -> vector<2x48xf32>
    %283 = vector.broadcast %8 : vector<1x48xf32> to vector<2x48xf32>
    %284 = arith.addf %282, %283 : vector<2x48xf32>
    %285 = vector.extract_strided_slice %280 {offsets = [0, 0], sizes = [2, 16], strides = [1, 1]} : vector<2x48xf32> to vector<2x16xf32>
    %286 = vector.extract_strided_slice %284 {offsets = [0, 0], sizes = [2, 16], strides = [1, 1]} : vector<2x48xf32> to vector<2x16xf32>
    %287 = arith.addf %285, %286 : vector<2x16xf32>
    %288 = arith.negf %287 : vector<2x16xf32>
    %289 = math.exp %288 : vector<2x16xf32>
    %cst_52 = arith.constant 1.000000e+00 : f32
    %290 = vector.broadcast %cst_52 : f32 to vector<2x16xf32>
    %291 = arith.addf %290, %289 : vector<2x16xf32>
    %292 = arith.divf %290, %291 : vector<2x16xf32>
    %293 = vector.extract_strided_slice %280 {offsets = [0, 16], sizes = [2, 16], strides = [1, 1]} : vector<2x48xf32> to vector<2x16xf32>
    %294 = vector.extract_strided_slice %284 {offsets = [0, 16], sizes = [2, 16], strides = [1, 1]} : vector<2x48xf32> to vector<2x16xf32>
    %295 = arith.addf %293, %294 : vector<2x16xf32>
    %296 = arith.negf %295 : vector<2x16xf32>
    %297 = math.exp %296 : vector<2x16xf32>
    %cst_53 = arith.constant 1.000000e+00 : f32
    %298 = vector.broadcast %cst_53 : f32 to vector<2x16xf32>
    %299 = arith.addf %298, %297 : vector<2x16xf32>
    %300 = arith.divf %298, %299 : vector<2x16xf32>
    %301 = vector.extract_strided_slice %280 {offsets = [0, 32], sizes = [2, 16], strides = [1, 1]} : vector<2x48xf32> to vector<2x16xf32>
    %302 = vector.extract_strided_slice %284 {offsets = [0, 32], sizes = [2, 16], strides = [1, 1]} : vector<2x48xf32> to vector<2x16xf32>
    %303 = arith.mulf %292, %302 : vector<2x16xf32>
    %304 = arith.addf %301, %303 : vector<2x16xf32>
    %305 = math.tanh %304 : vector<2x16xf32>
    %cst_54 = arith.constant 1.000000e+00 : f32
    %306 = vector.broadcast %cst_54 : f32 to vector<2x16xf32>
    %307 = arith.subf %306, %300 : vector<2x16xf32>
    %308 = arith.mulf %307, %305 : vector<2x16xf32>
    %309 = arith.mulf %300, %279 : vector<2x16xf32>
    %310 = arith.addf %308, %309 : vector<2x16xf32>
    %311 = vector.extract_strided_slice %29 {offsets = [18, 0], sizes = [2, 48], strides = [1, 1]} : vector<28x48xf32> to vector<2x48xf32>
    %312 = arith.truncf %310 : vector<2x16xf32> to vector<2x16xbf16>
    %cst_55 = arith.constant dense<0.000000e+00> : vector<2x48xf32>
    %313 = tpu.matmul %312, %3, %cst_55 {dimension_numbers = #tpu.dot_dimension_numbers<[1], [0], [0], [1], [0, 0, 1, 1], [], []>} : vector<2x16xbf16>, vector<16x48xbf16>, vector<2x48xf32> -> vector<2x48xf32>
    %314 = vector.broadcast %8 : vector<1x48xf32> to vector<2x48xf32>
    %315 = arith.addf %313, %314 : vector<2x48xf32>
    %316 = vector.extract_strided_slice %311 {offsets = [0, 0], sizes = [2, 16], strides = [1, 1]} : vector<2x48xf32> to vector<2x16xf32>
    %317 = vector.extract_strided_slice %315 {offsets = [0, 0], sizes = [2, 16], strides = [1, 1]} : vector<2x48xf32> to vector<2x16xf32>
    %318 = arith.addf %316, %317 : vector<2x16xf32>
    %319 = arith.negf %318 : vector<2x16xf32>
    %320 = math.exp %319 : vector<2x16xf32>
    %cst_56 = arith.constant 1.000000e+00 : f32
    %321 = vector.broadcast %cst_56 : f32 to vector<2x16xf32>
    %322 = arith.addf %321, %320 : vector<2x16xf32>
    %323 = arith.divf %321, %322 : vector<2x16xf32>
    %324 = vector.extract_strided_slice %311 {offsets = [0, 16], sizes = [2, 16], strides = [1, 1]} : vector<2x48xf32> to vector<2x16xf32>
    %325 = vector.extract_strided_slice %315 {offsets = [0, 16], sizes = [2, 16], strides = [1, 1]} : vector<2x48xf32> to vector<2x16xf32>
    %326 = arith.addf %324, %325 : vector<2x16xf32>
    %327 = arith.negf %326 : vector<2x16xf32>
    %328 = math.exp %327 : vector<2x16xf32>
    %cst_57 = arith.constant 1.000000e+00 : f32
    %329 = vector.broadcast %cst_57 : f32 to vector<2x16xf32>
    %330 = arith.addf %329, %328 : vector<2x16xf32>
    %331 = arith.divf %329, %330 : vector<2x16xf32>
    %332 = vector.extract_strided_slice %311 {offsets = [0, 32], sizes = [2, 16], strides = [1, 1]} : vector<2x48xf32> to vector<2x16xf32>
    %333 = vector.extract_strided_slice %315 {offsets = [0, 32], sizes = [2, 16], strides = [1, 1]} : vector<2x48xf32> to vector<2x16xf32>
    %334 = arith.mulf %323, %333 : vector<2x16xf32>
    %335 = arith.addf %332, %334 : vector<2x16xf32>
    %336 = math.tanh %335 : vector<2x16xf32>
    %cst_58 = arith.constant 1.000000e+00 : f32
    %337 = vector.broadcast %cst_58 : f32 to vector<2x16xf32>
    %338 = arith.subf %337, %331 : vector<2x16xf32>
    %339 = arith.mulf %338, %336 : vector<2x16xf32>
    %340 = arith.mulf %331, %310 : vector<2x16xf32>
    %341 = arith.addf %339, %340 : vector<2x16xf32>
    %342 = vector.extract_strided_slice %29 {offsets = [20, 0], sizes = [2, 48], strides = [1, 1]} : vector<28x48xf32> to vector<2x48xf32>
    %343 = arith.truncf %341 : vector<2x16xf32> to vector<2x16xbf16>
    %cst_59 = arith.constant dense<0.000000e+00> : vector<2x48xf32>
    %344 = tpu.matmul %343, %3, %cst_59 {dimension_numbers = #tpu.dot_dimension_numbers<[1], [0], [0], [1], [0, 0, 1, 1], [], []>} : vector<2x16xbf16>, vector<16x48xbf16>, vector<2x48xf32> -> vector<2x48xf32>
    %345 = vector.broadcast %8 : vector<1x48xf32> to vector<2x48xf32>
    %346 = arith.addf %344, %345 : vector<2x48xf32>
    %347 = vector.extract_strided_slice %342 {offsets = [0, 0], sizes = [2, 16], strides = [1, 1]} : vector<2x48xf32> to vector<2x16xf32>
    %348 = vector.extract_strided_slice %346 {offsets = [0, 0], sizes = [2, 16], strides = [1, 1]} : vector<2x48xf32> to vector<2x16xf32>
    %349 = arith.addf %347, %348 : vector<2x16xf32>
    %350 = arith.negf %349 : vector<2x16xf32>
    %351 = math.exp %350 : vector<2x16xf32>
    %cst_60 = arith.constant 1.000000e+00 : f32
    %352 = vector.broadcast %cst_60 : f32 to vector<2x16xf32>
    %353 = arith.addf %352, %351 : vector<2x16xf32>
    %354 = arith.divf %352, %353 : vector<2x16xf32>
    %355 = vector.extract_strided_slice %342 {offsets = [0, 16], sizes = [2, 16], strides = [1, 1]} : vector<2x48xf32> to vector<2x16xf32>
    %356 = vector.extract_strided_slice %346 {offsets = [0, 16], sizes = [2, 16], strides = [1, 1]} : vector<2x48xf32> to vector<2x16xf32>
    %357 = arith.addf %355, %356 : vector<2x16xf32>
    %358 = arith.negf %357 : vector<2x16xf32>
    %359 = math.exp %358 : vector<2x16xf32>
    %cst_61 = arith.constant 1.000000e+00 : f32
    %360 = vector.broadcast %cst_61 : f32 to vector<2x16xf32>
    %361 = arith.addf %360, %359 : vector<2x16xf32>
    %362 = arith.divf %360, %361 : vector<2x16xf32>
    %363 = vector.extract_strided_slice %342 {offsets = [0, 32], sizes = [2, 16], strides = [1, 1]} : vector<2x48xf32> to vector<2x16xf32>
    %364 = vector.extract_strided_slice %346 {offsets = [0, 32], sizes = [2, 16], strides = [1, 1]} : vector<2x48xf32> to vector<2x16xf32>
    %365 = arith.mulf %354, %364 : vector<2x16xf32>
    %366 = arith.addf %363, %365 : vector<2x16xf32>
    %367 = math.tanh %366 : vector<2x16xf32>
    %cst_62 = arith.constant 1.000000e+00 : f32
    %368 = vector.broadcast %cst_62 : f32 to vector<2x16xf32>
    %369 = arith.subf %368, %362 : vector<2x16xf32>
    %370 = arith.mulf %369, %367 : vector<2x16xf32>
    %371 = arith.mulf %362, %341 : vector<2x16xf32>
    %372 = arith.addf %370, %371 : vector<2x16xf32>
    %373 = vector.extract_strided_slice %29 {offsets = [22, 0], sizes = [2, 48], strides = [1, 1]} : vector<28x48xf32> to vector<2x48xf32>
    %374 = arith.truncf %372 : vector<2x16xf32> to vector<2x16xbf16>
    %cst_63 = arith.constant dense<0.000000e+00> : vector<2x48xf32>
    %375 = tpu.matmul %374, %3, %cst_63 {dimension_numbers = #tpu.dot_dimension_numbers<[1], [0], [0], [1], [0, 0, 1, 1], [], []>} : vector<2x16xbf16>, vector<16x48xbf16>, vector<2x48xf32> -> vector<2x48xf32>
    %376 = vector.broadcast %8 : vector<1x48xf32> to vector<2x48xf32>
    %377 = arith.addf %375, %376 : vector<2x48xf32>
    %378 = vector.extract_strided_slice %373 {offsets = [0, 0], sizes = [2, 16], strides = [1, 1]} : vector<2x48xf32> to vector<2x16xf32>
    %379 = vector.extract_strided_slice %377 {offsets = [0, 0], sizes = [2, 16], strides = [1, 1]} : vector<2x48xf32> to vector<2x16xf32>
    %380 = arith.addf %378, %379 : vector<2x16xf32>
    %381 = arith.negf %380 : vector<2x16xf32>
    %382 = math.exp %381 : vector<2x16xf32>
    %cst_64 = arith.constant 1.000000e+00 : f32
    %383 = vector.broadcast %cst_64 : f32 to vector<2x16xf32>
    %384 = arith.addf %383, %382 : vector<2x16xf32>
    %385 = arith.divf %383, %384 : vector<2x16xf32>
    %386 = vector.extract_strided_slice %373 {offsets = [0, 16], sizes = [2, 16], strides = [1, 1]} : vector<2x48xf32> to vector<2x16xf32>
    %387 = vector.extract_strided_slice %377 {offsets = [0, 16], sizes = [2, 16], strides = [1, 1]} : vector<2x48xf32> to vector<2x16xf32>
    %388 = arith.addf %386, %387 : vector<2x16xf32>
    %389 = arith.negf %388 : vector<2x16xf32>
    %390 = math.exp %389 : vector<2x16xf32>
    %cst_65 = arith.constant 1.000000e+00 : f32
    %391 = vector.broadcast %cst_65 : f32 to vector<2x16xf32>
    %392 = arith.addf %391, %390 : vector<2x16xf32>
    %393 = arith.divf %391, %392 : vector<2x16xf32>
    %394 = vector.extract_strided_slice %373 {offsets = [0, 32], sizes = [2, 16], strides = [1, 1]} : vector<2x48xf32> to vector<2x16xf32>
    %395 = vector.extract_strided_slice %377 {offsets = [0, 32], sizes = [2, 16], strides = [1, 1]} : vector<2x48xf32> to vector<2x16xf32>
    %396 = arith.mulf %385, %395 : vector<2x16xf32>
    %397 = arith.addf %394, %396 : vector<2x16xf32>
    %398 = math.tanh %397 : vector<2x16xf32>
    %cst_66 = arith.constant 1.000000e+00 : f32
    %399 = vector.broadcast %cst_66 : f32 to vector<2x16xf32>
    %400 = arith.subf %399, %393 : vector<2x16xf32>
    %401 = arith.mulf %400, %398 : vector<2x16xf32>
    %402 = arith.mulf %393, %372 : vector<2x16xf32>
    %403 = arith.addf %401, %402 : vector<2x16xf32>
    %404 = vector.extract_strided_slice %29 {offsets = [24, 0], sizes = [2, 48], strides = [1, 1]} : vector<28x48xf32> to vector<2x48xf32>
    %405 = arith.truncf %403 : vector<2x16xf32> to vector<2x16xbf16>
    %cst_67 = arith.constant dense<0.000000e+00> : vector<2x48xf32>
    %406 = tpu.matmul %405, %3, %cst_67 {dimension_numbers = #tpu.dot_dimension_numbers<[1], [0], [0], [1], [0, 0, 1, 1], [], []>} : vector<2x16xbf16>, vector<16x48xbf16>, vector<2x48xf32> -> vector<2x48xf32>
    %407 = vector.broadcast %8 : vector<1x48xf32> to vector<2x48xf32>
    %408 = arith.addf %406, %407 : vector<2x48xf32>
    %409 = vector.extract_strided_slice %404 {offsets = [0, 0], sizes = [2, 16], strides = [1, 1]} : vector<2x48xf32> to vector<2x16xf32>
    %410 = vector.extract_strided_slice %408 {offsets = [0, 0], sizes = [2, 16], strides = [1, 1]} : vector<2x48xf32> to vector<2x16xf32>
    %411 = arith.addf %409, %410 : vector<2x16xf32>
    %412 = arith.negf %411 : vector<2x16xf32>
    %413 = math.exp %412 : vector<2x16xf32>
    %cst_68 = arith.constant 1.000000e+00 : f32
    %414 = vector.broadcast %cst_68 : f32 to vector<2x16xf32>
    %415 = arith.addf %414, %413 : vector<2x16xf32>
    %416 = arith.divf %414, %415 : vector<2x16xf32>
    %417 = vector.extract_strided_slice %404 {offsets = [0, 16], sizes = [2, 16], strides = [1, 1]} : vector<2x48xf32> to vector<2x16xf32>
    %418 = vector.extract_strided_slice %408 {offsets = [0, 16], sizes = [2, 16], strides = [1, 1]} : vector<2x48xf32> to vector<2x16xf32>
    %419 = arith.addf %417, %418 : vector<2x16xf32>
    %420 = arith.negf %419 : vector<2x16xf32>
    %421 = math.exp %420 : vector<2x16xf32>
    %cst_69 = arith.constant 1.000000e+00 : f32
    %422 = vector.broadcast %cst_69 : f32 to vector<2x16xf32>
    %423 = arith.addf %422, %421 : vector<2x16xf32>
    %424 = arith.divf %422, %423 : vector<2x16xf32>
    %425 = vector.extract_strided_slice %404 {offsets = [0, 32], sizes = [2, 16], strides = [1, 1]} : vector<2x48xf32> to vector<2x16xf32>
    %426 = vector.extract_strided_slice %408 {offsets = [0, 32], sizes = [2, 16], strides = [1, 1]} : vector<2x48xf32> to vector<2x16xf32>
    %427 = arith.mulf %416, %426 : vector<2x16xf32>
    %428 = arith.addf %425, %427 : vector<2x16xf32>
    %429 = math.tanh %428 : vector<2x16xf32>
    %cst_70 = arith.constant 1.000000e+00 : f32
    %430 = vector.broadcast %cst_70 : f32 to vector<2x16xf32>
    %431 = arith.subf %430, %424 : vector<2x16xf32>
    %432 = arith.mulf %431, %429 : vector<2x16xf32>
    %433 = arith.mulf %424, %403 : vector<2x16xf32>
    %434 = arith.addf %432, %433 : vector<2x16xf32>
    %435 = vector.extract_strided_slice %29 {offsets = [26, 0], sizes = [2, 48], strides = [1, 1]} : vector<28x48xf32> to vector<2x48xf32>
    %436 = arith.truncf %434 : vector<2x16xf32> to vector<2x16xbf16>
    %cst_71 = arith.constant dense<0.000000e+00> : vector<2x48xf32>
    %437 = tpu.matmul %436, %3, %cst_71 {dimension_numbers = #tpu.dot_dimension_numbers<[1], [0], [0], [1], [0, 0, 1, 1], [], []>} : vector<2x16xbf16>, vector<16x48xbf16>, vector<2x48xf32> -> vector<2x48xf32>
    %438 = vector.broadcast %8 : vector<1x48xf32> to vector<2x48xf32>
    %439 = arith.addf %437, %438 : vector<2x48xf32>
    %440 = vector.extract_strided_slice %435 {offsets = [0, 0], sizes = [2, 16], strides = [1, 1]} : vector<2x48xf32> to vector<2x16xf32>
    %441 = vector.extract_strided_slice %439 {offsets = [0, 0], sizes = [2, 16], strides = [1, 1]} : vector<2x48xf32> to vector<2x16xf32>
    %442 = arith.addf %440, %441 : vector<2x16xf32>
    %443 = arith.negf %442 : vector<2x16xf32>
    %444 = math.exp %443 : vector<2x16xf32>
    %cst_72 = arith.constant 1.000000e+00 : f32
    %445 = vector.broadcast %cst_72 : f32 to vector<2x16xf32>
    %446 = arith.addf %445, %444 : vector<2x16xf32>
    %447 = arith.divf %445, %446 : vector<2x16xf32>
    %448 = vector.extract_strided_slice %435 {offsets = [0, 16], sizes = [2, 16], strides = [1, 1]} : vector<2x48xf32> to vector<2x16xf32>
    %449 = vector.extract_strided_slice %439 {offsets = [0, 16], sizes = [2, 16], strides = [1, 1]} : vector<2x48xf32> to vector<2x16xf32>
    %450 = arith.addf %448, %449 : vector<2x16xf32>
    %451 = arith.negf %450 : vector<2x16xf32>
    %452 = math.exp %451 : vector<2x16xf32>
    %cst_73 = arith.constant 1.000000e+00 : f32
    %453 = vector.broadcast %cst_73 : f32 to vector<2x16xf32>
    %454 = arith.addf %453, %452 : vector<2x16xf32>
    %455 = arith.divf %453, %454 : vector<2x16xf32>
    %456 = vector.extract_strided_slice %435 {offsets = [0, 32], sizes = [2, 16], strides = [1, 1]} : vector<2x48xf32> to vector<2x16xf32>
    %457 = vector.extract_strided_slice %439 {offsets = [0, 32], sizes = [2, 16], strides = [1, 1]} : vector<2x48xf32> to vector<2x16xf32>
    %458 = arith.mulf %447, %457 : vector<2x16xf32>
    %459 = arith.addf %456, %458 : vector<2x16xf32>
    %460 = math.tanh %459 : vector<2x16xf32>
    %cst_74 = arith.constant 1.000000e+00 : f32
    %461 = vector.broadcast %cst_74 : f32 to vector<2x16xf32>
    %462 = arith.subf %461, %455 : vector<2x16xf32>
    %463 = arith.mulf %462, %460 : vector<2x16xf32>
    %464 = arith.mulf %455, %434 : vector<2x16xf32>
    %465 = arith.addf %463, %464 : vector<2x16xf32>
    %cst_75 = arith.constant 0.000000e+00 : f32
    %466 = vector.broadcast %cst_75 : f32 to vector<4x8xf32>
    %467 = vector.extract_strided_slice %30 {offsets = [4, 0], sizes = [4, 24], strides = [1, 1]} : vector<28x24xf32> to vector<4x24xf32>
    %468 = arith.truncf %466 : vector<4x8xf32> to vector<4x8xbf16>
    %cst_76 = arith.constant dense<0.000000e+00> : vector<4x24xf32>
    %469 = tpu.matmul %468, %4, %cst_76 {dimension_numbers = #tpu.dot_dimension_numbers<[1], [0], [0], [1], [0, 0, 1, 1], [], []>} : vector<4x8xbf16>, vector<8x24xbf16>, vector<4x24xf32> -> vector<4x24xf32>
    %470 = vector.broadcast %9 : vector<1x24xf32> to vector<4x24xf32>
    %471 = arith.addf %469, %470 : vector<4x24xf32>
    %472 = vector.extract_strided_slice %467 {offsets = [0, 0], sizes = [4, 8], strides = [1, 1]} : vector<4x24xf32> to vector<4x8xf32>
    %473 = vector.extract_strided_slice %471 {offsets = [0, 0], sizes = [4, 8], strides = [1, 1]} : vector<4x24xf32> to vector<4x8xf32>
    %474 = arith.addf %472, %473 : vector<4x8xf32>
    %475 = arith.negf %474 : vector<4x8xf32>
    %476 = math.exp %475 : vector<4x8xf32>
    %cst_77 = arith.constant 1.000000e+00 : f32
    %477 = vector.broadcast %cst_77 : f32 to vector<4x8xf32>
    %478 = arith.addf %477, %476 : vector<4x8xf32>
    %479 = arith.divf %477, %478 : vector<4x8xf32>
    %480 = vector.extract_strided_slice %467 {offsets = [0, 8], sizes = [4, 8], strides = [1, 1]} : vector<4x24xf32> to vector<4x8xf32>
    %481 = vector.extract_strided_slice %471 {offsets = [0, 8], sizes = [4, 8], strides = [1, 1]} : vector<4x24xf32> to vector<4x8xf32>
    %482 = arith.addf %480, %481 : vector<4x8xf32>
    %483 = arith.negf %482 : vector<4x8xf32>
    %484 = math.exp %483 : vector<4x8xf32>
    %cst_78 = arith.constant 1.000000e+00 : f32
    %485 = vector.broadcast %cst_78 : f32 to vector<4x8xf32>
    %486 = arith.addf %485, %484 : vector<4x8xf32>
    %487 = arith.divf %485, %486 : vector<4x8xf32>
    %488 = vector.extract_strided_slice %467 {offsets = [0, 16], sizes = [4, 8], strides = [1, 1]} : vector<4x24xf32> to vector<4x8xf32>
    %489 = vector.extract_strided_slice %471 {offsets = [0, 16], sizes = [4, 8], strides = [1, 1]} : vector<4x24xf32> to vector<4x8xf32>
    %490 = arith.mulf %479, %489 : vector<4x8xf32>
    %491 = arith.addf %488, %490 : vector<4x8xf32>
    %492 = math.tanh %491 : vector<4x8xf32>
    %cst_79 = arith.constant 1.000000e+00 : f32
    %493 = vector.broadcast %cst_79 : f32 to vector<4x8xf32>
    %494 = arith.subf %493, %487 : vector<4x8xf32>
    %495 = arith.mulf %494, %492 : vector<4x8xf32>
    %496 = arith.mulf %487, %466 : vector<4x8xf32>
    %497 = arith.addf %495, %496 : vector<4x8xf32>
    %498 = vector.extract_strided_slice %30 {offsets = [8, 0], sizes = [4, 24], strides = [1, 1]} : vector<28x24xf32> to vector<4x24xf32>
    %499 = arith.truncf %497 : vector<4x8xf32> to vector<4x8xbf16>
    %cst_80 = arith.constant dense<0.000000e+00> : vector<4x24xf32>
    %500 = tpu.matmul %499, %4, %cst_80 {dimension_numbers = #tpu.dot_dimension_numbers<[1], [0], [0], [1], [0, 0, 1, 1], [], []>} : vector<4x8xbf16>, vector<8x24xbf16>, vector<4x24xf32> -> vector<4x24xf32>
    %501 = vector.broadcast %9 : vector<1x24xf32> to vector<4x24xf32>
    %502 = arith.addf %500, %501 : vector<4x24xf32>
    %503 = vector.extract_strided_slice %498 {offsets = [0, 0], sizes = [4, 8], strides = [1, 1]} : vector<4x24xf32> to vector<4x8xf32>
    %504 = vector.extract_strided_slice %502 {offsets = [0, 0], sizes = [4, 8], strides = [1, 1]} : vector<4x24xf32> to vector<4x8xf32>
    %505 = arith.addf %503, %504 : vector<4x8xf32>
    %506 = arith.negf %505 : vector<4x8xf32>
    %507 = math.exp %506 : vector<4x8xf32>
    %cst_81 = arith.constant 1.000000e+00 : f32
    %508 = vector.broadcast %cst_81 : f32 to vector<4x8xf32>
    %509 = arith.addf %508, %507 : vector<4x8xf32>
    %510 = arith.divf %508, %509 : vector<4x8xf32>
    %511 = vector.extract_strided_slice %498 {offsets = [0, 8], sizes = [4, 8], strides = [1, 1]} : vector<4x24xf32> to vector<4x8xf32>
    %512 = vector.extract_strided_slice %502 {offsets = [0, 8], sizes = [4, 8], strides = [1, 1]} : vector<4x24xf32> to vector<4x8xf32>
    %513 = arith.addf %511, %512 : vector<4x8xf32>
    %514 = arith.negf %513 : vector<4x8xf32>
    %515 = math.exp %514 : vector<4x8xf32>
    %cst_82 = arith.constant 1.000000e+00 : f32
    %516 = vector.broadcast %cst_82 : f32 to vector<4x8xf32>
    %517 = arith.addf %516, %515 : vector<4x8xf32>
    %518 = arith.divf %516, %517 : vector<4x8xf32>
    %519 = vector.extract_strided_slice %498 {offsets = [0, 16], sizes = [4, 8], strides = [1, 1]} : vector<4x24xf32> to vector<4x8xf32>
    %520 = vector.extract_strided_slice %502 {offsets = [0, 16], sizes = [4, 8], strides = [1, 1]} : vector<4x24xf32> to vector<4x8xf32>
    %521 = arith.mulf %510, %520 : vector<4x8xf32>
    %522 = arith.addf %519, %521 : vector<4x8xf32>
    %523 = math.tanh %522 : vector<4x8xf32>
    %cst_83 = arith.constant 1.000000e+00 : f32
    %524 = vector.broadcast %cst_83 : f32 to vector<4x8xf32>
    %525 = arith.subf %524, %518 : vector<4x8xf32>
    %526 = arith.mulf %525, %523 : vector<4x8xf32>
    %527 = arith.mulf %518, %497 : vector<4x8xf32>
    %528 = arith.addf %526, %527 : vector<4x8xf32>
    %529 = vector.extract_strided_slice %30 {offsets = [12, 0], sizes = [4, 24], strides = [1, 1]} : vector<28x24xf32> to vector<4x24xf32>
    %530 = arith.truncf %528 : vector<4x8xf32> to vector<4x8xbf16>
    %cst_84 = arith.constant dense<0.000000e+00> : vector<4x24xf32>
    %531 = tpu.matmul %530, %4, %cst_84 {dimension_numbers = #tpu.dot_dimension_numbers<[1], [0], [0], [1], [0, 0, 1, 1], [], []>} : vector<4x8xbf16>, vector<8x24xbf16>, vector<4x24xf32> -> vector<4x24xf32>
    %532 = vector.broadcast %9 : vector<1x24xf32> to vector<4x24xf32>
    %533 = arith.addf %531, %532 : vector<4x24xf32>
    %534 = vector.extract_strided_slice %529 {offsets = [0, 0], sizes = [4, 8], strides = [1, 1]} : vector<4x24xf32> to vector<4x8xf32>
    %535 = vector.extract_strided_slice %533 {offsets = [0, 0], sizes = [4, 8], strides = [1, 1]} : vector<4x24xf32> to vector<4x8xf32>
    %536 = arith.addf %534, %535 : vector<4x8xf32>
    %537 = arith.negf %536 : vector<4x8xf32>
    %538 = math.exp %537 : vector<4x8xf32>
    %cst_85 = arith.constant 1.000000e+00 : f32
    %539 = vector.broadcast %cst_85 : f32 to vector<4x8xf32>
    %540 = arith.addf %539, %538 : vector<4x8xf32>
    %541 = arith.divf %539, %540 : vector<4x8xf32>
    %542 = vector.extract_strided_slice %529 {offsets = [0, 8], sizes = [4, 8], strides = [1, 1]} : vector<4x24xf32> to vector<4x8xf32>
    %543 = vector.extract_strided_slice %533 {offsets = [0, 8], sizes = [4, 8], strides = [1, 1]} : vector<4x24xf32> to vector<4x8xf32>
    %544 = arith.addf %542, %543 : vector<4x8xf32>
    %545 = arith.negf %544 : vector<4x8xf32>
    %546 = math.exp %545 : vector<4x8xf32>
    %cst_86 = arith.constant 1.000000e+00 : f32
    %547 = vector.broadcast %cst_86 : f32 to vector<4x8xf32>
    %548 = arith.addf %547, %546 : vector<4x8xf32>
    %549 = arith.divf %547, %548 : vector<4x8xf32>
    %550 = vector.extract_strided_slice %529 {offsets = [0, 16], sizes = [4, 8], strides = [1, 1]} : vector<4x24xf32> to vector<4x8xf32>
    %551 = vector.extract_strided_slice %533 {offsets = [0, 16], sizes = [4, 8], strides = [1, 1]} : vector<4x24xf32> to vector<4x8xf32>
    %552 = arith.mulf %541, %551 : vector<4x8xf32>
    %553 = arith.addf %550, %552 : vector<4x8xf32>
    %554 = math.tanh %553 : vector<4x8xf32>
    %cst_87 = arith.constant 1.000000e+00 : f32
    %555 = vector.broadcast %cst_87 : f32 to vector<4x8xf32>
    %556 = arith.subf %555, %549 : vector<4x8xf32>
    %557 = arith.mulf %556, %554 : vector<4x8xf32>
    %558 = arith.mulf %549, %528 : vector<4x8xf32>
    %559 = arith.addf %557, %558 : vector<4x8xf32>
    %560 = vector.extract_strided_slice %30 {offsets = [16, 0], sizes = [4, 24], strides = [1, 1]} : vector<28x24xf32> to vector<4x24xf32>
    %561 = arith.truncf %559 : vector<4x8xf32> to vector<4x8xbf16>
    %cst_88 = arith.constant dense<0.000000e+00> : vector<4x24xf32>
    %562 = tpu.matmul %561, %4, %cst_88 {dimension_numbers = #tpu.dot_dimension_numbers<[1], [0], [0], [1], [0, 0, 1, 1], [], []>} : vector<4x8xbf16>, vector<8x24xbf16>, vector<4x24xf32> -> vector<4x24xf32>
    %563 = vector.broadcast %9 : vector<1x24xf32> to vector<4x24xf32>
    %564 = arith.addf %562, %563 : vector<4x24xf32>
    %565 = vector.extract_strided_slice %560 {offsets = [0, 0], sizes = [4, 8], strides = [1, 1]} : vector<4x24xf32> to vector<4x8xf32>
    %566 = vector.extract_strided_slice %564 {offsets = [0, 0], sizes = [4, 8], strides = [1, 1]} : vector<4x24xf32> to vector<4x8xf32>
    %567 = arith.addf %565, %566 : vector<4x8xf32>
    %568 = arith.negf %567 : vector<4x8xf32>
    %569 = math.exp %568 : vector<4x8xf32>
    %cst_89 = arith.constant 1.000000e+00 : f32
    %570 = vector.broadcast %cst_89 : f32 to vector<4x8xf32>
    %571 = arith.addf %570, %569 : vector<4x8xf32>
    %572 = arith.divf %570, %571 : vector<4x8xf32>
    %573 = vector.extract_strided_slice %560 {offsets = [0, 8], sizes = [4, 8], strides = [1, 1]} : vector<4x24xf32> to vector<4x8xf32>
    %574 = vector.extract_strided_slice %564 {offsets = [0, 8], sizes = [4, 8], strides = [1, 1]} : vector<4x24xf32> to vector<4x8xf32>
    %575 = arith.addf %573, %574 : vector<4x8xf32>
    %576 = arith.negf %575 : vector<4x8xf32>
    %577 = math.exp %576 : vector<4x8xf32>
    %cst_90 = arith.constant 1.000000e+00 : f32
    %578 = vector.broadcast %cst_90 : f32 to vector<4x8xf32>
    %579 = arith.addf %578, %577 : vector<4x8xf32>
    %580 = arith.divf %578, %579 : vector<4x8xf32>
    %581 = vector.extract_strided_slice %560 {offsets = [0, 16], sizes = [4, 8], strides = [1, 1]} : vector<4x24xf32> to vector<4x8xf32>
    %582 = vector.extract_strided_slice %564 {offsets = [0, 16], sizes = [4, 8], strides = [1, 1]} : vector<4x24xf32> to vector<4x8xf32>
    %583 = arith.mulf %572, %582 : vector<4x8xf32>
    %584 = arith.addf %581, %583 : vector<4x8xf32>
    %585 = math.tanh %584 : vector<4x8xf32>
    %cst_91 = arith.constant 1.000000e+00 : f32
    %586 = vector.broadcast %cst_91 : f32 to vector<4x8xf32>
    %587 = arith.subf %586, %580 : vector<4x8xf32>
    %588 = arith.mulf %587, %585 : vector<4x8xf32>
    %589 = arith.mulf %580, %559 : vector<4x8xf32>
    %590 = arith.addf %588, %589 : vector<4x8xf32>
    %591 = vector.extract_strided_slice %30 {offsets = [20, 0], sizes = [4, 24], strides = [1, 1]} : vector<28x24xf32> to vector<4x24xf32>
    %592 = arith.truncf %590 : vector<4x8xf32> to vector<4x8xbf16>
    %cst_92 = arith.constant dense<0.000000e+00> : vector<4x24xf32>
    %593 = tpu.matmul %592, %4, %cst_92 {dimension_numbers = #tpu.dot_dimension_numbers<[1], [0], [0], [1], [0, 0, 1, 1], [], []>} : vector<4x8xbf16>, vector<8x24xbf16>, vector<4x24xf32> -> vector<4x24xf32>
    %594 = vector.broadcast %9 : vector<1x24xf32> to vector<4x24xf32>
    %595 = arith.addf %593, %594 : vector<4x24xf32>
    %596 = vector.extract_strided_slice %591 {offsets = [0, 0], sizes = [4, 8], strides = [1, 1]} : vector<4x24xf32> to vector<4x8xf32>
    %597 = vector.extract_strided_slice %595 {offsets = [0, 0], sizes = [4, 8], strides = [1, 1]} : vector<4x24xf32> to vector<4x8xf32>
    %598 = arith.addf %596, %597 : vector<4x8xf32>
    %599 = arith.negf %598 : vector<4x8xf32>
    %600 = math.exp %599 : vector<4x8xf32>
    %cst_93 = arith.constant 1.000000e+00 : f32
    %601 = vector.broadcast %cst_93 : f32 to vector<4x8xf32>
    %602 = arith.addf %601, %600 : vector<4x8xf32>
    %603 = arith.divf %601, %602 : vector<4x8xf32>
    %604 = vector.extract_strided_slice %591 {offsets = [0, 8], sizes = [4, 8], strides = [1, 1]} : vector<4x24xf32> to vector<4x8xf32>
    %605 = vector.extract_strided_slice %595 {offsets = [0, 8], sizes = [4, 8], strides = [1, 1]} : vector<4x24xf32> to vector<4x8xf32>
    %606 = arith.addf %604, %605 : vector<4x8xf32>
    %607 = arith.negf %606 : vector<4x8xf32>
    %608 = math.exp %607 : vector<4x8xf32>
    %cst_94 = arith.constant 1.000000e+00 : f32
    %609 = vector.broadcast %cst_94 : f32 to vector<4x8xf32>
    %610 = arith.addf %609, %608 : vector<4x8xf32>
    %611 = arith.divf %609, %610 : vector<4x8xf32>
    %612 = vector.extract_strided_slice %591 {offsets = [0, 16], sizes = [4, 8], strides = [1, 1]} : vector<4x24xf32> to vector<4x8xf32>
    %613 = vector.extract_strided_slice %595 {offsets = [0, 16], sizes = [4, 8], strides = [1, 1]} : vector<4x24xf32> to vector<4x8xf32>
    %614 = arith.mulf %603, %613 : vector<4x8xf32>
    %615 = arith.addf %612, %614 : vector<4x8xf32>
    %616 = math.tanh %615 : vector<4x8xf32>
    %cst_95 = arith.constant 1.000000e+00 : f32
    %617 = vector.broadcast %cst_95 : f32 to vector<4x8xf32>
    %618 = arith.subf %617, %611 : vector<4x8xf32>
    %619 = arith.mulf %618, %616 : vector<4x8xf32>
    %620 = arith.mulf %611, %590 : vector<4x8xf32>
    %621 = arith.addf %619, %620 : vector<4x8xf32>
    %622 = vector.extract_strided_slice %30 {offsets = [24, 0], sizes = [4, 24], strides = [1, 1]} : vector<28x24xf32> to vector<4x24xf32>
    %623 = arith.truncf %621 : vector<4x8xf32> to vector<4x8xbf16>
    %cst_96 = arith.constant dense<0.000000e+00> : vector<4x24xf32>
    %624 = tpu.matmul %623, %4, %cst_96 {dimension_numbers = #tpu.dot_dimension_numbers<[1], [0], [0], [1], [0, 0, 1, 1], [], []>} : vector<4x8xbf16>, vector<8x24xbf16>, vector<4x24xf32> -> vector<4x24xf32>
    %625 = vector.broadcast %9 : vector<1x24xf32> to vector<4x24xf32>
    %626 = arith.addf %624, %625 : vector<4x24xf32>
    %627 = vector.extract_strided_slice %622 {offsets = [0, 0], sizes = [4, 8], strides = [1, 1]} : vector<4x24xf32> to vector<4x8xf32>
    %628 = vector.extract_strided_slice %626 {offsets = [0, 0], sizes = [4, 8], strides = [1, 1]} : vector<4x24xf32> to vector<4x8xf32>
    %629 = arith.addf %627, %628 : vector<4x8xf32>
    %630 = arith.negf %629 : vector<4x8xf32>
    %631 = math.exp %630 : vector<4x8xf32>
    %cst_97 = arith.constant 1.000000e+00 : f32
    %632 = vector.broadcast %cst_97 : f32 to vector<4x8xf32>
    %633 = arith.addf %632, %631 : vector<4x8xf32>
    %634 = arith.divf %632, %633 : vector<4x8xf32>
    %635 = vector.extract_strided_slice %622 {offsets = [0, 8], sizes = [4, 8], strides = [1, 1]} : vector<4x24xf32> to vector<4x8xf32>
    %636 = vector.extract_strided_slice %626 {offsets = [0, 8], sizes = [4, 8], strides = [1, 1]} : vector<4x24xf32> to vector<4x8xf32>
    %637 = arith.addf %635, %636 : vector<4x8xf32>
    %638 = arith.negf %637 : vector<4x8xf32>
    %639 = math.exp %638 : vector<4x8xf32>
    %cst_98 = arith.constant 1.000000e+00 : f32
    %640 = vector.broadcast %cst_98 : f32 to vector<4x8xf32>
    %641 = arith.addf %640, %639 : vector<4x8xf32>
    %642 = arith.divf %640, %641 : vector<4x8xf32>
    %643 = vector.extract_strided_slice %622 {offsets = [0, 16], sizes = [4, 8], strides = [1, 1]} : vector<4x24xf32> to vector<4x8xf32>
    %644 = vector.extract_strided_slice %626 {offsets = [0, 16], sizes = [4, 8], strides = [1, 1]} : vector<4x24xf32> to vector<4x8xf32>
    %645 = arith.mulf %634, %644 : vector<4x8xf32>
    %646 = arith.addf %643, %645 : vector<4x8xf32>
    %647 = math.tanh %646 : vector<4x8xf32>
    %cst_99 = arith.constant 1.000000e+00 : f32
    %648 = vector.broadcast %cst_99 : f32 to vector<4x8xf32>
    %649 = arith.subf %648, %642 : vector<4x8xf32>
    %650 = arith.mulf %649, %647 : vector<4x8xf32>
    %651 = arith.mulf %642, %621 : vector<4x8xf32>
    %652 = arith.addf %650, %651 : vector<4x8xf32>
    %653 = vector.extract_strided_slice %652 {offsets = [0, 0], sizes = [2, 8], strides = [1, 1]} : vector<4x8xf32> to vector<2x8xf32>
    %654 = vector.extract_strided_slice %652 {offsets = [2, 0], sizes = [2, 8], strides = [1, 1]} : vector<4x8xf32> to vector<2x8xf32>
    %655 = tpu.concatenate %653, %654 in 1 : vector<2x8xf32>, vector<2x8xf32> -> vector<2x16xf32>
    %656 = tpu.concatenate %465, %655 in 1 : vector<2x16xf32>, vector<2x16xf32> -> vector<2x32xf32>
    %657 = arith.truncf %656 : vector<2x32xf32> to vector<2x32xbf16>
    %cst_100 = arith.constant dense<0.000000e+00> : vector<2x8xf32>
    %658 = tpu.matmul %657, %5, %cst_100 {dimension_numbers = #tpu.dot_dimension_numbers<[1], [0], [0], [1], [0, 0, 1, 1], [], []>} : vector<2x32xbf16>, vector<32x8xbf16>, vector<2x8xf32> -> vector<2x8xf32>
    %659 = vector.broadcast %10 : vector<1x8xf32> to vector<2x8xf32>
    %660 = arith.addf %658, %659 : vector<2x8xf32>
    %cst_101 = arith.constant 0.000000e+00 : f32
    %661 = vector.broadcast %cst_101 : f32 to vector<2x8xf32>
    %662 = vector.extract_strided_slice %14 {offsets = [24, 0], sizes = [2, 8], strides = [1, 1]} : vector<32x8xf32> to vector<2x8xf32>
    %663 = vector.extract_strided_slice %11 {offsets = [0, 0], sizes = [1, 8], strides = [1, 1]} : vector<4x8xf32> to vector<1x8xf32>
    %664 = vector.broadcast %663 : vector<1x8xf32> to vector<2x8xf32>
    %665 = arith.mulf %662, %664 : vector<2x8xf32>
    %666 = arith.addf %661, %665 : vector<2x8xf32>
    %667 = vector.extract_strided_slice %14 {offsets = [26, 0], sizes = [2, 8], strides = [1, 1]} : vector<32x8xf32> to vector<2x8xf32>
    %668 = vector.extract_strided_slice %11 {offsets = [1, 0], sizes = [1, 8], strides = [1, 1]} : vector<4x8xf32> to vector<1x8xf32>
    %669 = vector.broadcast %668 : vector<1x8xf32> to vector<2x8xf32>
    %670 = arith.mulf %667, %669 : vector<2x8xf32>
    %671 = arith.addf %666, %670 : vector<2x8xf32>
    %672 = vector.extract_strided_slice %14 {offsets = [28, 0], sizes = [2, 8], strides = [1, 1]} : vector<32x8xf32> to vector<2x8xf32>
    %673 = vector.extract_strided_slice %11 {offsets = [2, 0], sizes = [1, 8], strides = [1, 1]} : vector<4x8xf32> to vector<1x8xf32>
    %674 = vector.broadcast %673 : vector<1x8xf32> to vector<2x8xf32>
    %675 = arith.mulf %672, %674 : vector<2x8xf32>
    %676 = arith.addf %671, %675 : vector<2x8xf32>
    %677 = vector.extract_strided_slice %14 {offsets = [30, 0], sizes = [2, 8], strides = [1, 1]} : vector<32x8xf32> to vector<2x8xf32>
    %678 = vector.extract_strided_slice %11 {offsets = [3, 0], sizes = [1, 8], strides = [1, 1]} : vector<4x8xf32> to vector<1x8xf32>
    %679 = vector.broadcast %678 : vector<1x8xf32> to vector<2x8xf32>
    %680 = arith.mulf %677, %679 : vector<2x8xf32>
    %681 = arith.addf %676, %680 : vector<2x8xf32>
    %682 = arith.addf %660, %681 : vector<2x8xf32>
    %683 = arith.negf %682 : vector<2x8xf32>
    %684 = math.exp %683 : vector<2x8xf32>
    %cst_102 = arith.constant 1.000000e+00 : f32
    %685 = vector.broadcast %cst_102 : f32 to vector<2x8xf32>
    %686 = arith.addf %685, %684 : vector<2x8xf32>
    %687 = arith.divf %685, %686 : vector<2x8xf32>
    %c0_103 = arith.constant 0 : index
    %c0_104 = arith.constant 0 : index
    %688 = vector.load %arg3[%c0_103, %c0_104] : memref<2x8xf32, #tpu.memory_space<vmem>>, vector<2x8xf32>
    tpu.vector_store %arg3[%c0_103, %c0_104], %687 {strides = array<i32>} : memref<2x8xf32, #tpu.memory_space<vmem>>, vector<2x8xf32>,
    return
  }
}

</mosaic_0001>

<llo_original>
// kernel: lstnet_forward.1
$region0: #{lstnet_forward.1}
  #allocation0 [shape = 'u32[]', space=smem, size = 0x4, offset = 0x4, fixed_abs, tag = 'smem constant byte address 0x4 - core index']
  #allocation1 [shape = 'u32[144,128]{1,0:T(1,128)}', space=vmem, size = 0x12000, scoped, tag = 'internal scratch']
  %s0 = inlined_call_operand.vmem [shape: f32[32,8], index: 0, kind: input, shape index: {}]
  %s1 = inlined_call_operand.hbm [shape: bf16[144,128], index: 1, kind: input, shape index: {}]
  %s2 = inlined_call_operand.vmem [shape: f32[16,128], index: 2, kind: input, shape index: {}]
  %s3 = inlined_call_operand.hbm [shape: f32[2,8], index: 3, kind: output, shape index: {}]
  %s4 = sld [smem:[#allocation0]]
  $region26: #{lstnet_forward.1} parent=0
    _
  %s6 = ssub.s32 1, %s4
  %s7 = scalar_select 0, %s6, %s4
  $region1: #{lstnet_forward.1} parent=0
    #allocation2 [shape = 'u8[36864]{0}', space=vmem, size = 0x9000, scoped, tag = 'input window, operand 1, single buffered']
    #allocation3 [shape = 's32[1]{0}', space=sflag, size = 0x4, scoped, tag = 'scoped memory for lstnet_forward.1']
    #allocation4 [shape = 's32[1]{0}', space=sflag, size = 0x4, scoped, tag = 'scoped memory for lstnet_forward.1']
    #allocation5 [shape = 'u8[1024]{0}', space=vmem, size = 0x400, scoped, tag = 'output window, operand 0, single buffered']
    %8 = vsyncpa [#allocation3], 0
    %9 = vsyncpa [#allocation4], 0
    // Predicated region
    $region2: #{lstnet_forward.1} parent=1 // pred_check
      _
    $region3: #{lstnet_forward.1} parent=1 // pred_check_branch
      %11 = sbr.rel (0) target = $region5
    $region4: #{lstnet_forward.1} parent=1 // pred_region
      _
    $region5: #{lstnet_forward.1} parent=1 // pred_fallthru
      _
    // Predicated region
    $region6: #{lstnet_forward.1} parent=1 // pred_check
      _
    $region7: #{lstnet_forward.1} parent=1 // pred_check_branch
      %13 = sbr.rel (0) target = $region9
    $region8: #{lstnet_forward.1} parent=1 // pred_region
      %s15 = ssub.s32 1152, 1152
      %16 = vsyncadd [#allocation3], %s15
      %s17 = sshll.u32 [#allocation2], 4
      %s18 = int_to_ptr.vmem [resolvable:$true] %s17
      %23 = dma.hbm_to_vmem [thread:$0]  %s1, 1152, %s18, [#allocation3], 64, 64, 4
    $region9: #{lstnet_forward.1} parent=1 // pred_fallthru
      _
    // Predicated region
    $region10: #{lstnet_forward.1} parent=1 // pred_check
      _
    $region11: #{lstnet_forward.1} parent=1 // pred_check_branch
      %25 = sbr.rel (0) target = $region13
    $region12: #{lstnet_forward.1} parent=1 // pred_region
      _
    $region13: #{lstnet_forward.1} parent=1 // pred_fallthru
      _
    // Predicated region
    $region14: #{lstnet_forward.1} parent=1 // pred_check
      _
    $region15: #{lstnet_forward.1} parent=1 // pred_check_branch
      %27 = sbr.rel (0) target = $region17
    $region16: #{lstnet_forward.1} parent=1 // pred_region
      %28 = dma.done [#allocation3], 1152
    $region17: #{lstnet_forward.1} parent=1 // pred_fallthru
      _
    %v30 = vld [vmem:[#allocation2] sm:$0xf]
    %v31 = vld [vmem:[#allocation2 + $0x4] sm:$0xf]
    %v32 = vld [vmem:[#allocation2 + $0x8] sm:$0xf]
    %v33 = vld [vmem:[#allocation2 + $0xc] sm:$0xf]
    %v34 = vld [vmem:[#allocation2 + $0x10] sm:$0xf]
    %v35 = vld [vmem:[#allocation2 + $0x14] sm:$0xf]
    %v36 = vld [vmem:[#allocation2 + $0x18] sm:$0xf]
    %v37 = vld [vmem:[#allocation2 + $0x20] sm:$0xf]
    %v38 = vld [vmem:[#allocation2 + $0x24] sm:$0xf]
    %v39 = vld [vmem:[#allocation2 + $0x28] sm:$0xf]
    %v40 = vld [vmem:[#allocation2 + $0x2c] sm:$0xf]
    %v41 = vld [vmem:[#allocation2 + $0x30] sm:$0xf]
    %v42 = vld [vmem:[#allocation2 + $0x38] sm:$0xf]
    %v43 = vld [vmem:[#allocation2 + $0x3c] sm:$0xf]
    %v44 = vld [vmem:[#allocation2 + $0x40] sm:$0xf]
    %v45 = vld [vmem:[#allocation2 + $0x44] sm:$0xf]
    %v46 = vld [vmem:[%s2] sm:$0x1]
    %v47 = vld [vmem:[%s2 + $0x1] sm:$0x1]
    %v48 = vld [vmem:[%s2 + $0x2] sm:$0x1]
    %v49 = vld [vmem:[%s2 + $0x3] sm:$0x1]
    %v50 = vld [vmem:[%s2 + $0x4] sm:$0x1]
    %v51 = vld [vmem:[%s2 + $0x8] sm:$0xf]
    %v52 = vld [vmem:[%s0] sm:$0xff]
    %v53 = vld [vmem:[%s0 + $0x8] sm:$0xff]
    %v54 = vld [vmem:[%s0 + $0x10] sm:$0xff]
    %v55 = vld [vmem:[%s0 + $0x18] sm:$0xff]
    %v56 = vpack.c.bf16 %v53, %v52
    %v57 = vpack.c.bf16 %v55, %v54
    %v62 = vunpack.c.l.b16 %v30
    %v63 = vunpack.c.l.b16 %v31
    %v64 = vunpack.c.l.b16 %v32
    %v65 = vunpack.c.l.b16 %v33
    %v66 = vpack.c.b16 %v63, %v62
    %v67 = vpack.c.b16 %v65, %v64
    %vm68 = vcmask 261120
    %v70 = vsel %vm68, %v66, 0
    %v73 = vsel %vm68, %v67, 0
    %75 = vmatprep.subr.bf16.mxu0 0
    %76 = vmatpush1.bf16.msra.mxu0 %v56
    %77 = vmatprep.subr.bf16.mxu0 0
    %78 = vmatpush1.bf16.msra.mxu0 %v57
    %79 = vmatprep.subr.bf16.mxu0 0
    %80 = vmatpush1.bf16.msra.mxu0 0
    %81 = vmatprep.subr.bf16.mxu0 0
    %82 = vmatpush1.bf16.msra.mxu0 0
    %83 = vmatprep.subr.bf16.mxu0 0
    %84 = vmatpush1.bf16.msra.mxu0 0
    %85 = vmatprep.subr.bf16.mxu0 0
    %86 = vmatpush1.bf16.msra.mxu0 0
    %87 = vmatprep.subr.bf16.mxu0 0
    %88 = vmatpush1.bf16.msra.mxu0 0
    %89 = vmatprep.subr.bf16.mxu0 0
    %90 = vmatpush1.bf16.msra.mxu0 0
    %91 = vmatprep.subr.bf16.mxu0 0
    %92 = vmatpush1.bf16.msra.mxu0 0
    %93 = vmatprep.subr.bf16.mxu0 0
    %94 = vmatpush1.bf16.msra.mxu0 0
    %95 = vmatprep.subr.bf16.mxu0 0
    %96 = vmatpush1.bf16.msra.mxu0 0
    %97 = vmatprep.subr.bf16.mxu0 0
    %98 = vmatpush1.bf16.msra.mxu0 0
    %99 = vmatprep.subr.bf16.mxu0 0
    %100 = vmatpush1.bf16.msra.mxu0 0
    %101 = vmatprep.subr.bf16.mxu0 0
    %102 = vmatpush1.bf16.msra.mxu0 0
    %103 = vmatprep.subr.bf16.mxu0 0
    %104 = vmatpush1.bf16.msra.mxu0 0
    %105 = vmatprep.subr.bf16.mxu0 0
    %106 = vmatpush1.bf16.msra.mxu0 0
    %107 = vmatprep.mubr.bf16.mxu0 0
    %108 = vmatmul.mubr.bf16.gmra.mrb[0].mxu0 %v70
    %v109 = vpop.f32.mrb[0].mxu0
    %v110 = vadd.f32 0.0, %v109
    %v111 = vpop.f32.mrb[0].mxu0
    %v112 = vpop.f32.mrb[0].mxu0
    %v113 = vadd.f32 0.0, %v112
    %v114 = vpop.f32.mrb[0].mxu0
    %115 = vmatprep.mubr.bf16.mxu0 0
    %116 = vmatmul.mubr.bf16.gmra.mrb[0].mxu0 %v73
    %v117 = vpop.f32.mrb[0].mxu0
    %v118 = vadd.f32 0.0, %v117
    %v119 = vpop.f32.mrb[0].mxu0
    %v120 = vpop.f32.mrb[0].mxu0
    %v121 = vadd.f32 0.0, %v120
    %v122 = vpop.f32.mrb[0].mxu0
    %123 = vdwg.mxu0
    %vm128 = vcmask 1045504
    %v129 = vrot.slane %v110, 2
    %v130 = vrot.slane %v113, 2
    %v131 = vsel %vm128, %v129, %v130
    %v132 = vrot.slane %v118, 2
    %v133 = vsel %vm128, %v130, %v132
    %v134 = vrot.slane %v121, 2
    %v135 = vsel %vm128, %v132, %v134
    %136 = vrot.lane.b32.xlu0 %v131, 8
    %v137 = vpop.permute.xlu0 %136
    %138 = vrot.lane.b32.xlu0 %v133, 8
    %v139 = vpop.permute.xlu0 %138
    %140 = vrot.lane.b32.xlu0 %v135, 8
    %v141 = vpop.permute.xlu0 %140
    %142 = vrot.lane.b32.xlu0 %v134, 8
    %v143 = vpop.permute.xlu0 %142
    %vm148 = vcmask 1043456
    %v149 = vrot.slane %v110, 4
    %v150 = vrot.slane %v113, 4
    %v151 = vsel %vm148, %v149, %v150
    %v152 = vrot.slane %v118, 4
    %v153 = vsel %vm148, %v150, %v152
    %v154 = vrot.slane %v121, 4
    %v155 = vsel %vm148, %v152, %v154
    %156 = vrot.lane.b32.xlu0 %v151, 16
    %v157 = vpop.permute.xlu0 %156
    %158 = vrot.lane.b32.xlu0 %v153, 16
    %v159 = vpop.permute.xlu0 %158
    %160 = vrot.lane.b32.xlu0 %v155, 16
    %v161 = vpop.permute.xlu0 %160
    %162 = vrot.lane.b32.xlu0 %v154, 16
    %v163 = vpop.permute.xlu0 %162
    %vm168 = vcmask 64512
    %v169 = vsel %vm168, %v110, %v137
    %v170 = vsel %vm168, %v113, %v139
    %v171 = vsel %vm168, %v118, %v141
    %v172 = vsel %vm168, %v121, %v143
    %vm173 = vcmask 130048
    %v174 = vsel %vm173, %v169, %v157
    %v175 = vsel %vm173, %v170, %v159
    %v176 = vsel %vm173, %v171, %v161
    %v177 = vsel %vm173, %v172, %v163
    %v178 = vpack.c.bf16 %v175, %v174
    %v179 = vpack.c.bf16 %v177, %v176
    %v180 = vlaneseq
    %v181 = vshrl.u32 %v180, 7
    %v182 = vsub.s32 0, %v181
    %v183 = vrot.slane %v46, %v182
    %v187 = vunpack.c.l.b16 %v34
    %v188 = vunpack.c.l.b16 %v35
    %v189 = vunpack.c.l.b16 %v36
    %v190 = vpack.c.b16 %v188, %v187
    %v191 = vpack.c.b16 %v189, %v189
    %vm193 = vcmask 195584
    %v195 = vsel %vm193, %v178, 0
    %v198 = vsel %vm193, %v179, 0
    %v201 = vsel %vm148, %v191, 0
    %203 = vmatprep.subr.bf16.mxu0 0
    %204 = vmatpush1.bf16.msra.mxu0 %v190
    %205 = vmatprep.subr.bf16.mxu0 0
    %206 = vmatpush1.bf16.msra.mxu0 %v201
    %207 = vmatprep.subr.bf16.mxu0 0
    %208 = vmatpush1.bf16.msra.mxu0 0
    %209 = vmatprep.subr.bf16.mxu0 0
    %210 = vmatpush1.bf16.msra.mxu0 0
    %211 = vmatprep.subr.bf16.mxu0 0
    %212 = vmatpush1.bf16.msra.mxu0 0
    %213 = vmatprep.subr.bf16.mxu0 0
    %214 = vmatpush1.bf16.msra.mxu0 0
    %215 = vmatprep.subr.bf16.mxu0 0
    %216 = vmatpush1.bf16.msra.mxu0 0
    %217 = vmatprep.subr.bf16.mxu0 0
    %218 = vmatpush1.bf16.msra.mxu0 0
    %219 = vmatprep.subr.bf16.mxu0 0
    %220 = vmatpush1.bf16.msra.mxu0 0
    %221 = vmatprep.subr.bf16.mxu0 0
    %222 = vmatpush1.bf16.msra.mxu0 0
    %223 = vmatprep.subr.bf16.mxu0 0
    %224 = vmatpush1.bf16.msra.mxu0 0
    %225 = vmatprep.subr.bf16.mxu0 0
    %226 = vmatpush1.bf16.msra.mxu0 0
    %227 = vmatprep.subr.bf16.mxu0 0
    %228 = vmatpush1.bf16.msra.mxu0 0
    %229 = vmatprep.subr.bf16.mxu0 0
    %230 = vmatpush1.bf16.msra.mxu0 0
    %231 = vmatprep.subr.bf16.mxu0 0
    %232 = vmatpush1.bf16.msra.mxu0 0
    %233 = vmatprep.subr.bf16.mxu0 0
    %234 = vmatpush1.bf16.msra.mxu0 0
    %235 = vmatprep.mubr.bf16.mxu0 0
    %236 = vmatmul.mubr.bf16.gmra.mrb[0].mxu0 %v195
    %v237 = vpop.f32.mrb[0].mxu0
    %v238 = vadd.f32 %v183, %v237
    %v239 = vpop.f32.mrb[0].mxu0
    %v240 = vpop.f32.mrb[0].mxu0
    %v241 = vadd.f32 %v183, %v240
    %v242 = vpop.f32.mrb[0].mxu0
    %243 = vmatprep.mubr.bf16.mxu0 0
    %244 = vmatmul.mubr.bf16.gmra.mrb[0].mxu0 %v198
    %v245 = vpop.f32.mrb[0].mxu0
    %v246 = vadd.f32 %v183, %v245
    %v247 = vpop.f32.mrb[0].mxu0
    %v248 = vpop.f32.mrb[0].mxu0
    %v249 = vadd.f32 %v183, %v248
    %v250 = vpop.f32.mrb[0].mxu0
    %251 = vdwg.mxu0
    %v252 = vmax.f32 %v238, 0.0
    %v253 = vmax.f32 %v241, 0.0
    %v254 = vmax.f32 %v246, 0.0
    %v255 = vmax.f32 %v249, 0.0
    %v256 = vpack.c.bf16 %v253, %v252
    %v257 = vpack.c.bf16 %v255, %v254
    %v258 = vlaneseq
    %v259 = vshrl.u32 %v258, 7
    %v260 = vsub.s32 0, %v259
    %v261 = vrot.slane %v47, %v260
    %v264 = vunpack.c.l.b16 %v37
    %v265 = vunpack.c.l.b16 %v38
    %v266 = vpack.c.b16 %v265, %v264
    %v269 = vsel %vm173, %v256, 0
    %v272 = vsel %vm173, %v257, 0
    %274 = vmatprep.subr.bf16.mxu0 0
    %275 = vmatpush1.bf16.msra.mxu0 %v266
    %276 = vmatprep.subr.bf16.mxu0 0
    %277 = vmatpush1.bf16.msra.mxu0 0
    %278 = vmatprep.subr.bf16.mxu0 0
    %279 = vmatpush1.bf16.msra.mxu0 0
    %280 = vmatprep.subr.bf16.mxu0 0
    %281 = vmatpush1.bf16.msra.mxu0 0
    %282 = vmatprep.subr.bf16.mxu0 0
    %283 = vmatpush1.bf16.msra.mxu0 0
    %284 = vmatprep.subr.bf16.mxu0 0
    %285 = vmatpush1.bf16.msra.mxu0 0
    %286 = vmatprep.subr.bf16.mxu0 0
    %287 = vmatpush1.bf16.msra.mxu0 0
    %288 = vmatprep.subr.bf16.mxu0 0
    %289 = vmatpush1.bf16.msra.mxu0 0
    %290 = vmatprep.subr.bf16.mxu0 0
    %291 = vmatpush1.bf16.msra.mxu0 0
    %292 = vmatprep.subr.bf16.mxu0 0
    %293 = vmatpush1.bf16.msra.mxu0 0
    %294 = vmatprep.subr.bf16.mxu0 0
    %295 = vmatpush1.bf16.msra.mxu0 0
    %296 = vmatprep.subr.bf16.mxu0 0
    %297 = vmatpush1.bf16.msra.mxu0 0
    %298 = vmatprep.subr.bf16.mxu0 0
    %299 = vmatpush1.bf16.msra.mxu0 0
    %300 = vmatprep.subr.bf16.mxu0 0
    %301 = vmatpush1.bf16.msra.mxu0 0
    %302 = vmatprep.subr.bf16.mxu0 0
    %303 = vmatpush1.bf16.msra.mxu0 0
    %304 = vmatprep.subr.bf16.mxu0 0
    %305 = vmatpush1.bf16.msra.mxu0 0
    %306 = vmatprep.mubr.bf16.mxu0 0
    %307 = vmatmul.mubr.bf16.gmra.mrb[0].mxu0 %v269
    %v308 = vpop.f32.mrb[0].mxu0
    %v309 = vadd.f32 %v261, %v308
    %v310 = vpop.f32.mrb[0].mxu0
    %v311 = vpop.f32.mrb[0].mxu0
    %v312 = vadd.f32 %v261, %v311
    %v313 = vpop.f32.mrb[0].mxu0
    %314 = vmatprep.mubr.bf16.mxu0 0
    %315 = vmatmul.mubr.bf16.gmra.mrb[0].mxu0 %v272
    %v316 = vpop.f32.mrb[0].mxu0
    %v317 = vadd.f32 %v261, %v316
    %v318 = vpop.f32.mrb[0].mxu0
    %v319 = vpop.f32.mrb[0].mxu0
    %v320 = vadd.f32 %v261, %v319
    %v321 = vpop.f32.mrb[0].mxu0
    %322 = vdwg.mxu0
    %v323 = vlaneseq
    %v324 = vshrl.u32 %v323, 7
    %v325 = vsub.s32 0, %v324
    %v326 = vrot.slane %v48, %v325
    %v329 = vunpack.c.l.b16 %v39
    %v330 = vunpack.c.l.b16 %v40
    %v331 = vpack.c.b16 %v330, %v329
    %v334 = vsel %vm173, 0, 0
    %336 = vmatprep.subr.bf16.mxu0 0
    %337 = vmatpush1.bf16.msra.mxu0 %v331
    %338 = vmatprep.subr.bf16.mxu0 0
    %339 = vmatpush1.bf16.msra.mxu0 0
    %340 = vmatprep.subr.bf16.mxu0 0
    %341 = vmatpush1.bf16.msra.mxu0 0
    %342 = vmatprep.subr.bf16.mxu0 0
    %343 = vmatpush1.bf16.msra.mxu0 0
    %344 = vmatprep.subr.bf16.mxu0 0
    %345 = vmatpush1.bf16.msra.mxu0 0
    %346 = vmatprep.subr.bf16.mxu0 0
    %347 = vmatpush1.bf16.msra.mxu0 0
    %348 = vmatprep.subr.bf16.mxu0 0
    %349 = vmatpush1.bf16.msra.mxu0 0
    %350 = vmatprep.subr.bf16.mxu0 0
    %351 = vmatpush1.bf16.msra.mxu0 0
    %352 = vmatprep.subr.bf16.mxu0 0
    %353 = vmatpush1.bf16.msra.mxu0 0
    %354 = vmatprep.subr.bf16.mxu0 0
    %355 = vmatpush1.bf16.msra.mxu0 0
    %356 = vmatprep.subr.bf16.mxu0 0
    %357 = vmatpush1.bf16.msra.mxu0 0
    %358 = vmatprep.subr.bf16.mxu0 0
    %359 = vmatpush1.bf16.msra.mxu0 0
    %360 = vmatprep.subr.bf16.mxu0 0
    %361 = vmatpush1.bf16.msra.mxu0 0
    %362 = vmatprep.subr.bf16.mxu0 0
    %363 = vmatpush1.bf16.msra.mxu0 0
    %364 = vmatprep.subr.bf16.mxu0 0
    %365 = vmatpush1.bf16.msra.mxu0 0
    %366 = vmatprep.subr.bf16.mxu0 0
    %367 = vmatpush1.bf16.msra.mxu0 0
    %368 = vmatprep.mubr.bf16.mxu0 0
    %369 = vmatmul.mubr.bf16.gmra.mrb[0].mxu0 %v334
    %v370 = vpop.f32.mrb[0].mxu0
    %v371 = vadd.f32 %v326, %v370
    %v372 = vpop.f32.mrb[0].mxu0
    %v373 = vpop.f32.mrb[0].mxu0
    %v374 = vpop.f32.mrb[0].mxu0
    %375 = vdwg.mxu0
    %v376 = vadd.f32 %v309, %v371
    %v377 = vxor.u32 %v376, 2147483648
    %v378 = vmul.f32 %v377, 1.442695
    %v379 = vpow.pop %v378
    %v380 = vadd.f32 %v379, 1.0
    %v381 = vrcp.pop %v380
    %v382 = vmul.f32 1.0, %v381
    %384 = vrot.lane.b32.xlu0 %v371, 96
    %v385 = vpop.permute.xlu0 %384
    %v387 = vmul.f32 %v382, %v385
    %389 = vrot.lane.b32.xlu0 %v387, 32
    %v390 = vpop.permute.xlu0 %389
    %v392 = vadd.f32 %v309, %v390
    %v393 = vtanh.pop %v392
    %v394 = vsub.f32 1.0, %v382
    %396 = vrot.lane.b32.xlu0 %v393, 112
    %v397 = vpop.permute.xlu0 %396
    %v399 = vmul.f32 %v394, %v397
    %v400 = vmul.f32 %v382, 0.0
    %v401 = vadd.f32 %v399, %v400
    %v402 = vpack.c.bf16 %v401, %v401
    %404 = vrot.lane.b32.xlu0 %v402, 112
    %v405 = vpop.permute.xlu0 %404
    %v407 = vsel %vm173, %v405, 0
    %409 = vmatprep.subr.bf16.mxu0 0
    %410 = vmatpush1.bf16.msra.mxu0 %v331
    %411 = vmatprep.subr.bf16.mxu0 0
    %412 = vmatpush1.bf16.msra.mxu0 0
    %413 = vmatprep.subr.bf16.mxu0 0
    %414 = vmatpush1.bf16.msra.mxu0 0
    %415 = vmatprep.subr.bf16.mxu0 0
    %416 = vmatpush1.bf16.msra.mxu0 0
    %417 = vmatprep.subr.bf16.mxu0 0
    %418 = vmatpush1.bf16.msra.mxu0 0
    %419 = vmatprep.subr.bf16.mxu0 0
    %420 = vmatpush1.bf16.msra.mxu0 0
    %421 = vmatprep.subr.bf16.mxu0 0
    %422 = vmatpush1.bf16.msra.mxu0 0
    %423 = vmatprep.subr.bf16.mxu0 0
    %424 = vmatpush1.bf16.msra.mxu0 0
    %425 = vmatprep.subr.bf16.mxu0 0
    %426 = vmatpush1.bf16.msra.mxu0 0
    %427 = vmatprep.subr.bf16.mxu0 0
    %428 = vmatpush1.bf16.msra.mxu0 0
    %429 = vmatprep.subr.bf16.mxu0 0
    %430 = vmatpush1.bf16.msra.mxu0 0
    %431 = vmatprep.subr.bf16.mxu0 0
    %432 = vmatpush1.bf16.msra.mxu0 0
    %433 = vmatprep.subr.bf16.mxu0 0
    %434 = vmatpush1.bf16.msra.mxu0 0
    %435 = vmatprep.subr.bf16.mxu0 0
    %436 = vmatpush1.bf16.msra.mxu0 0
    %437 = vmatprep.subr.bf16.mxu0 0
    %438 = vmatpush1.bf16.msra.mxu0 0
    %439 = vmatprep.subr.bf16.mxu0 0
    %440 = vmatpush1.bf16.msra.mxu0 0
    %441 = vmatprep.mubr.bf16.mxu0 0
    %442 = vmatmul.mubr.bf16.gmra.mrb[0].mxu0 %v407
    %v443 = vpop.f32.mrb[0].mxu0
    %v444 = vadd.f32 %v326, %v443
    %v445 = vpop.f32.mrb[0].mxu0
    %v446 = vpop.f32.mrb[0].mxu0
    %v447 = vpop.f32.mrb[0].mxu0
    %448 = vdwg.mxu0
    %v450 = vrot.slane %v444, 6
    %v452 = vadd.f32 %v309, %v450
    %v453 = vxor.u32 %v452, 2147483648
    %v454 = vmul.f32 %v453, 1.442695
    %v455 = vpow.pop %v454
    %v456 = vadd.f32 %v455, 1.0
    %v457 = vrcp.pop %v456
    %v458 = vmul.f32 1.0, %v457
    %459 = vrot.lane.b32.xlu0 %v450, 96
    %v460 = vpop.permute.xlu0 %459
    %v462 = vmul.f32 %v458, %v460
    %464 = vrot.lane.b32.xlu0 %v462, 32
    %v465 = vpop.permute.xlu0 %464
    %v467 = vadd.f32 %v309, %v465
    %v468 = vtanh.pop %v467
    %v469 = vsub.f32 1.0, %v458
    %471 = vrot.lane.b32.xlu0 %v468, 112
    %v472 = vpop.permute.xlu0 %471
    %v474 = vmul.f32 %v469, %v472
    %v476 = vrot.slane %v401, 6
    %v478 = vmul.f32 %v458, %v476
    %v479 = vadd.f32 %v474, %v478
    %v480 = vpack.c.bf16 %v479, %v479
    %v482 = vrot.slane %v480, 1
    %483 = vrot.lane.b32.xlu0 %v482, 112
    %v484 = vpop.permute.xlu0 %483
    %v486 = vsel %vm173, %v484, 0
    %488 = vmatprep.subr.bf16.mxu0 0
    %489 = vmatpush1.bf16.msra.mxu0 %v331
    %490 = vmatprep.subr.bf16.mxu0 0
    %491 = vmatpush1.bf16.msra.mxu0 0
    %492 = vmatprep.subr.bf16.mxu0 0
    %493 = vmatpush1.bf16.msra.mxu0 0
    %494 = vmatprep.subr.bf16.mxu0 0
    %495 = vmatpush1.bf16.msra.mxu0 0
    %496 = vmatprep.subr.bf16.mxu0 0
    %497 = vmatpush1.bf16.msra.mxu0 0
    %498 = vmatprep.subr.bf16.mxu0 0
    %499 = vmatpush1.bf16.msra.mxu0 0
    %500 = vmatprep.subr.bf16.mxu0 0
    %501 = vmatpush1.bf16.msra.mxu0 0
    %502 = vmatprep.subr.bf16.mxu0 0
    %503 = vmatpush1.bf16.msra.mxu0 0
    %504 = vmatprep.subr.bf16.mxu0 0
    %505 = vmatpush1.bf16.msra.mxu0 0
    %506 = vmatprep.subr.bf16.mxu0 0
    %507 = vmatpush1.bf16.msra.mxu0 0
    %508 = vmatprep.subr.bf16.mxu0 0
    %509 = vmatpush1.bf16.msra.mxu0 0
    %510 = vmatprep.subr.bf16.mxu0 0
    %511 = vmatpush1.bf16.msra.mxu0 0
    %512 = vmatprep.subr.bf16.mxu0 0
    %513 = vmatpush1.bf16.msra.mxu0 0
    %514 = vmatprep.subr.bf16.mxu0 0
    %515 = vmatpush1.bf16.msra.mxu0 0
    %516 = vmatprep.subr.bf16.mxu0 0
    %517 = vmatpush1.bf16.msra.mxu0 0
    %518 = vmatprep.subr.bf16.mxu0 0
    %519 = vmatpush1.bf16.msra.mxu0 0
    %520 = vmatprep.mubr.bf16.mxu0 0
    %521 = vmatmul.mubr.bf16.gmra.mrb[0].mxu0 %v486
    %v522 = vpop.f32.mrb[0].mxu0
    %v523 = vadd.f32 %v326, %v522
    %v524 = vpop.f32.mrb[0].mxu0
    %v525 = vpop.f32.mrb[0].mxu0
    %v526 = vpop.f32.mrb[0].mxu0
    %527 = vdwg.mxu0
    %v529 = vrot.slane %v523, 4
    %v531 = vadd.f32 %v309, %v529
    %v532 = vxor.u32 %v531, 2147483648
    %v533 = vmul.f32 %v532, 1.442695
    %v534 = vpow.pop %v533
    %v535 = vadd.f32 %v534, 1.0
    %v536 = vrcp.pop %v535
    %v537 = vmul.f32 1.0, %v536
    %538 = vrot.lane.b32.xlu0 %v529, 96
    %v539 = vpop.permute.xlu0 %538
    %v541 = vmul.f32 %v537, %v539
    %543 = vrot.lane.b32.xlu0 %v541, 32
    %v544 = vpop.permute.xlu0 %543
    %v546 = vadd.f32 %v309, %v544
    %v547 = vtanh.pop %v546
    %v548 = vsub.f32 1.0, %v537
    %550 = vrot.lane.b32.xlu0 %v547, 112
    %v551 = vpop.permute.xlu0 %550
    %v553 = vmul.f32 %v548, %v551
    %v555 = vrot.slane %v479, 6
    %v557 = vmul.f32 %v537, %v555
    %v558 = vadd.f32 %v553, %v557
    %v559 = vpack.c.bf16 %v558, %v558
    %v561 = vrot.slane %v559, 2
    %562 = vrot.lane.b32.xlu0 %v561, 112
    %v563 = vpop.permute.xlu0 %562
    %v565 = vsel %vm173, %v563, 0
    %567 = vmatprep.subr.bf16.mxu0 0
    %568 = vmatpush1.bf16.msra.mxu0 %v331
    %569 = vmatprep.subr.bf16.mxu0 0
    %570 = vmatpush1.bf16.msra.mxu0 0
    %571 = vmatprep.subr.bf16.mxu0 0
    %572 = vmatpush1.bf16.msra.mxu0 0
    %573 = vmatprep.subr.bf16.mxu0 0
    %574 = vmatpush1.bf16.msra.mxu0 0
    %575 = vmatprep.subr.bf16.mxu0 0
    %576 = vmatpush1.bf16.msra.mxu0 0
    %577 = vmatprep.subr.bf16.mxu0 0
    %578 = vmatpush1.bf16.msra.mxu0 0
    %579 = vmatprep.subr.bf16.mxu0 0
    %580 = vmatpush1.bf16.msra.mxu0 0
    %581 = vmatprep.subr.bf16.mxu0 0
    %582 = vmatpush1.bf16.msra.mxu0 0
    %583 = vmatprep.subr.bf16.mxu0 0
    %584 = vmatpush1.bf16.msra.mxu0 0
    %585 = vmatprep.subr.bf16.mxu0 0
    %586 = vmatpush1.bf16.msra.mxu0 0
    %587 = vmatprep.subr.bf16.mxu0 0
    %588 = vmatpush1.bf16.msra.mxu0 0
    %589 = vmatprep.subr.bf16.mxu0 0
    %590 = vmatpush1.bf16.msra.mxu0 0
    %591 = vmatprep.subr.bf16.mxu0 0
    %592 = vmatpush1.bf16.msra.mxu0 0
    %593 = vmatprep.subr.bf16.mxu0 0
    %594 = vmatpush1.bf16.msra.mxu0 0
    %595 = vmatprep.subr.bf16.mxu0 0
    %596 = vmatpush1.bf16.msra.mxu0 0
    %597 = vmatprep.subr.bf16.mxu0 0
    %598 = vmatpush1.bf16.msra.mxu0 0
    %599 = vmatprep.mubr.bf16.mxu0 0
    %600 = vmatmul.mubr.bf16.gmra.mrb[0].mxu0 %v565
    %v601 = vpop.f32.mrb[0].mxu0
    %v602 = vadd.f32 %v326, %v601
    %v603 = vpop.f32.mrb[0].mxu0
    %v604 = vpop.f32.mrb[0].mxu0
    %v605 = vpop.f32.mrb[0].mxu0
    %606 = vdwg.mxu0
    %v608 = vrot.slane %v602, 2
    %v610 = vadd.f32 %v309, %v608
    %v611 = vxor.u32 %v610, 2147483648
    %v612 = vmul.f32 %v611, 1.442695
    %v613 = vpow.pop %v612
    %v614 = vadd.f32 %v613, 1.0
    %v615 = vrcp.pop %v614
    %v616 = vmul.f32 1.0, %v615
    %617 = vrot.lane.b32.xlu0 %v608, 96
    %v618 = vpop.permute.xlu0 %617
    %v620 = vmul.f32 %v616, %v618
    %622 = vrot.lane.b32.xlu0 %v620, 32
    %v623 = vpop.permute.xlu0 %622
    %v625 = vadd.f32 %v309, %v623
    %v626 = vtanh.pop %v625
    %v627 = vsub.f32 1.0, %v616
    %629 = vrot.lane.b32.xlu0 %v626, 112
    %v630 = vpop.permute.xlu0 %629
    %v632 = vmul.f32 %v627, %v630
    %v634 = vrot.slane %v558, 6
    %v636 = vmul.f32 %v616, %v634
    %v637 = vadd.f32 %v632, %v636
    %v638 = vpack.c.bf16 %v637, %v637
    %v640 = vrot.slane %v638, 3
    %641 = vrot.lane.b32.xlu0 %v640, 112
    %v642 = vpop.permute.xlu0 %641
    %v644 = vsel %vm173, %v642, 0
    %646 = vmatprep.subr.bf16.mxu0 0
    %647 = vmatpush1.bf16.msra.mxu0 %v331
    %648 = vmatprep.subr.bf16.mxu0 0
    %649 = vmatpush1.bf16.msra.mxu0 0
    %650 = vmatprep.subr.bf16.mxu0 0
    %651 = vmatpush1.bf16.msra.mxu0 0
    %652 = vmatprep.subr.bf16.mxu0 0
    %653 = vmatpush1.bf16.msra.mxu0 0
    %654 = vmatprep.subr.bf16.mxu0 0
    %655 = vmatpush1.bf16.msra.mxu0 0
    %656 = vmatprep.subr.bf16.mxu0 0
    %657 = vmatpush1.bf16.msra.mxu0 0
    %658 = vmatprep.subr.bf16.mxu0 0
    %659 = vmatpush1.bf16.msra.mxu0 0
    %660 = vmatprep.subr.bf16.mxu0 0
    %661 = vmatpush1.bf16.msra.mxu0 0
    %662 = vmatprep.subr.bf16.mxu0 0
    %663 = vmatpush1.bf16.msra.mxu0 0
    %664 = vmatprep.subr.bf16.mxu0 0
    %665 = vmatpush1.bf16.msra.mxu0 0
    %666 = vmatprep.subr.bf16.mxu0 0
    %667 = vmatpush1.bf16.msra.mxu0 0
    %668 = vmatprep.subr.bf16.mxu0 0
    %669 = vmatpush1.bf16.msra.mxu0 0
    %670 = vmatprep.subr.bf16.mxu0 0
    %671 = vmatpush1.bf16.msra.mxu0 0
    %672 = vmatprep.subr.bf16.mxu0 0
    %673 = vmatpush1.bf16.msra.mxu0 0
    %674 = vmatprep.subr.bf16.mxu0 0
    %675 = vmatpush1.bf16.msra.mxu0 0
    %676 = vmatprep.subr.bf16.mxu0 0
    %677 = vmatpush1.bf16.msra.mxu0 0
    %678 = vmatprep.mubr.bf16.mxu0 0
    %679 = vmatmul.mubr.bf16.gmra.mrb[0].mxu0 %v644
    %v680 = vpop.f32.mrb[0].mxu0
    %v681 = vadd.f32 %v326, %v680
    %v682 = vpop.f32.mrb[0].mxu0
    %v683 = vpop.f32.mrb[0].mxu0
    %v684 = vpop.f32.mrb[0].mxu0
    %685 = vdwg.mxu0
    %v686 = vadd.f32 %v312, %v681
    %v687 = vxor.u32 %v686, 2147483648
    %v688 = vmul.f32 %v687, 1.442695
    %v689 = vpow.pop %v688
    %v690 = vadd.f32 %v689, 1.0
    %v691 = vrcp.pop %v690
    %v692 = vmul.f32 1.0, %v691
    %694 = vrot.lane.b32.xlu0 %v681, 96
    %v695 = vpop.permute.xlu0 %694
    %v697 = vmul.f32 %v692, %v695
    %699 = vrot.lane.b32.xlu0 %v697, 32
    %v700 = vpop.permute.xlu0 %699
    %v702 = vadd.f32 %v312, %v700
    %v703 = vtanh.pop %v702
    %v704 = vsub.f32 1.0, %v692
    %706 = vrot.lane.b32.xlu0 %v703, 112
    %v707 = vpop.permute.xlu0 %706
    %v709 = vmul.f32 %v704, %v707
    %v711 = vrot.slane %v637, 6
    %v713 = vmul.f32 %v692, %v711
    %v714 = vadd.f32 %v709, %v713
    %v715 = vpack.c.bf16 %v714, %v714
    %717 = vrot.lane.b32.xlu0 %v715, 112
    %v718 = vpop.permute.xlu0 %717
    %v720 = vsel %vm173, %v718, 0
    %722 = vmatprep.subr.bf16.mxu0 0
    %723 = vmatpush1.bf16.msra.mxu0 %v331
    %724 = vmatprep.subr.bf16.mxu0 0
    %725 = vmatpush1.bf16.msra.mxu0 0
    %726 = vmatprep.subr.bf16.mxu0 0
    %727 = vmatpush1.bf16.msra.mxu0 0
    %728 = vmatprep.subr.bf16.mxu0 0
    %729 = vmatpush1.bf16.msra.mxu0 0
    %730 = vmatprep.subr.bf16.mxu0 0
    %731 = vmatpush1.bf16.msra.mxu0 0
    %732 = vmatprep.subr.bf16.mxu0 0
    %733 = vmatpush1.bf16.msra.mxu0 0
    %734 = vmatprep.subr.bf16.mxu0 0
    %735 = vmatpush1.bf16.msra.mxu0 0
    %736 = vmatprep.subr.bf16.mxu0 0
    %737 = vmatpush1.bf16.msra.mxu0 0
    %738 = vmatprep.subr.bf16.mxu0 0
    %739 = vmatpush1.bf16.msra.mxu0 0
    %740 = vmatprep.subr.bf16.mxu0 0
    %741 = vmatpush1.bf16.msra.mxu0 0
    %742 = vmatprep.subr.bf16.mxu0 0
    %743 = vmatpush1.bf16.msra.mxu0 0
    %744 = vmatprep.subr.bf16.mxu0 0
    %745 = vmatpush1.bf16.msra.mxu0 0
    %746 = vmatprep.subr.bf16.mxu0 0
    %747 = vmatpush1.bf16.msra.mxu0 0
    %748 = vmatprep.subr.bf16.mxu0 0
    %749 = vmatpush1.bf16.msra.mxu0 0
    %750 = vmatprep.subr.bf16.mxu0 0
    %751 = vmatpush1.bf16.msra.mxu0 0
    %752 = vmatprep.subr.bf16.mxu0 0
    %753 = vmatpush1.bf16.msra.mxu0 0
    %754 = vmatprep.mubr.bf16.mxu0 0
    %755 = vmatmul.mubr.bf16.gmra.mrb[0].mxu0 %v720
    %v756 = vpop.f32.mrb[0].mxu0
    %v757 = vadd.f32 %v326, %v756
    %v758 = vpop.f32.mrb[0].mxu0
    %v759 = vpop.f32.mrb[0].mxu0
    %v760 = vpop.f32.mrb[0].mxu0
    %761 = vdwg.mxu0
    %v763 = vrot.slane %v757, 6
    %v765 = vadd.f32 %v312, %v763
    %v766 = vxor.u32 %v765, 2147483648
    %v767 = vmul.f32 %v766, 1.442695
    %v768 = vpow.pop %v767
    %v769 = vadd.f32 %v768, 1.0
    %v770 = vrcp.pop %v769
    %v771 = vmul.f32 1.0, %v770
    %772 = vrot.lane.b32.xlu0 %v763, 96
    %v773 = vpop.permute.xlu0 %772
    %v775 = vmul.f32 %v771, %v773
    %777 = vrot.lane.b32.xlu0 %v775, 32
    %v778 = vpop.permute.xlu0 %777
    %v780 = vadd.f32 %v312, %v778
    %v781 = vtanh.pop %v780
    %v782 = vsub.f32 1.0, %v771
    %784 = vrot.lane.b32.xlu0 %v781, 112
    %v785 = vpop.permute.xlu0 %784
    %v787 = vmul.f32 %v782, %v785
    %v789 = vrot.slane %v714, 6
    %v791 = vmul.f32 %v771, %v789
    %v792 = vadd.f32 %v787, %v791
    %v793 = vpack.c.bf16 %v792, %v792
    %v795 = vrot.slane %v793, 1
    %796 = vrot.lane.b32.xlu0 %v795, 112
    %v797 = vpop.permute.xlu0 %796
    %v799 = vsel %vm173, %v797, 0
    %801 = vmatprep.subr.bf16.mxu0 0
    %802 = vmatpush1.bf16.msra.mxu0 %v331
    %803 = vmatprep.subr.bf16.mxu0 0
    %804 = vmatpush1.bf16.msra.mxu0 0
    %805 = vmatprep.subr.bf16.mxu0 0
    %806 = vmatpush1.bf16.msra.mxu0 0
    %807 = vmatprep.subr.bf16.mxu0 0
    %808 = vmatpush1.bf16.msra.mxu0 0
    %809 = vmatprep.subr.bf16.mxu0 0
    %810 = vmatpush1.bf16.msra.mxu0 0
    %811 = vmatprep.subr.bf16.mxu0 0
    %812 = vmatpush1.bf16.msra.mxu0 0
    %813 = vmatprep.subr.bf16.mxu0 0
    %814 = vmatpush1.bf16.msra.mxu0 0
    %815 = vmatprep.subr.bf16.mxu0 0
    %816 = vmatpush1.bf16.msra.mxu0 0
    %817 = vmatprep.subr.bf16.mxu0 0
    %818 = vmatpush1.bf16.msra.mxu0 0
    %819 = vmatprep.subr.bf16.mxu0 0
    %820 = vmatpush1.bf16.msra.mxu0 0
    %821 = vmatprep.subr.bf16.mxu0 0
    %822 = vmatpush1.bf16.msra.mxu0 0
    %823 = vmatprep.subr.bf16.mxu0 0
    %824 = vmatpush1.bf16.msra.mxu0 0
    %825 = vmatprep.subr.bf16.mxu0 0
    %826 = vmatpush1.bf16.msra.mxu0 0
    %827 = vmatprep.subr.bf16.mxu0 0
    %828 = vmatpush1.bf16.msra.mxu0 0
    %829 = vmatprep.subr.bf16.mxu0 0
    %830 = vmatpush1.bf16.msra.mxu0 0
    %831 = vmatprep.subr.bf16.mxu0 0
    %832 = vmatpush1.bf16.msra.mxu0 0
    %833 = vmatprep.mubr.bf16.mxu0 0
    %834 = vmatmul.mubr.bf16.gmra.mrb[0].mxu0 %v799
    %v835 = vpop.f32.mrb[0].mxu0
    %v836 = vadd.f32 %v326, %v835
    %v837 = vpop.f32.mrb[0].mxu0
    %v838 = vpop.f32.mrb[0].mxu0
    %v839 = vpop.f32.mrb[0].mxu0
    %840 = vdwg.mxu0
    %v842 = vrot.slane %v836, 4
    %v844 = vadd.f32 %v312, %v842
    %v845 = vxor.u32 %v844, 2147483648
    %v846 = vmul.f32 %v845, 1.442695
    %v847 = vpow.pop %v846
    %v848 = vadd.f32 %v847, 1.0
    %v849 = vrcp.pop %v848
    %v850 = vmul.f32 1.0, %v849
    %851 = vrot.lane.b32.xlu0 %v842, 96
    %v852 = vpop.permute.xlu0 %851
    %v854 = vmul.f32 %v850, %v852
    %856 = vrot.lane.b32.xlu0 %v854, 32
    %v857 = vpop.permute.xlu0 %856
    %v859 = vadd.f32 %v312, %v857
    %v860 = vtanh.pop %v859
    %v861 = vsub.f32 1.0, %v850
    %863 = vrot.lane.b32.xlu0 %v860, 112
    %v864 = vpop.permute.xlu0 %863
    %v866 = vmul.f32 %v861, %v864
    %v868 = vrot.slane %v792, 6
    %v870 = vmul.f32 %v850, %v868
    %v871 = vadd.f32 %v866, %v870
    %v872 = vpack.c.bf16 %v871, %v871
    %v874 = vrot.slane %v872, 2
    %875 = vrot.lane.b32.xlu0 %v874, 112
    %v876 = vpop.permute.xlu0 %875
    %v878 = vsel %vm173, %v876, 0
    %880 = vmatprep.subr.bf16.mxu0 0
    %881 = vmatpush1.bf16.msra.mxu0 %v331
    %882 = vmatprep.subr.bf16.mxu0 0
    %883 = vmatpush1.bf16.msra.mxu0 0
    %884 = vmatprep.subr.bf16.mxu0 0
    %885 = vmatpush1.bf16.msra.mxu0 0
    %886 = vmatprep.subr.bf16.mxu0 0
    %887 = vmatpush1.bf16.msra.mxu0 0
    %888 = vmatprep.subr.bf16.mxu0 0
    %889 = vmatpush1.bf16.msra.mxu0 0
    %890 = vmatprep.subr.bf16.mxu0 0
    %891 = vmatpush1.bf16.msra.mxu0 0
    %892 = vmatprep.subr.bf16.mxu0 0
    %893 = vmatpush1.bf16.msra.mxu0 0
    %894 = vmatprep.subr.bf16.mxu0 0
    %895 = vmatpush1.bf16.msra.mxu0 0
    %896 = vmatprep.subr.bf16.mxu0 0
    %897 = vmatpush1.bf16.msra.mxu0 0
    %898 = vmatprep.subr.bf16.mxu0 0
    %899 = vmatpush1.bf16.msra.mxu0 0
    %900 = vmatprep.subr.bf16.mxu0 0
    %901 = vmatpush1.bf16.msra.mxu0 0
    %902 = vmatprep.subr.bf16.mxu0 0
    %903 = vmatpush1.bf16.msra.mxu0 0
    %904 = vmatprep.subr.bf16.mxu0 0
    %905 = vmatpush1.bf16.msra.mxu0 0
    %906 = vmatprep.subr.bf16.mxu0 0
    %907 = vmatpush1.bf16.msra.mxu0 0
    %908 = vmatprep.subr.bf16.mxu0 0
    %909 = vmatpush1.bf16.msra.mxu0 0
    %910 = vmatprep.subr.bf16.mxu0 0
    %911 = vmatpush1.bf16.msra.mxu0 0
    %912 = vmatprep.mubr.bf16.mxu0 0
    %913 = vmatmul.mubr.bf16.gmra.mrb[0].mxu0 %v878
    %v914 = vpop.f32.mrb[0].mxu0
    %v915 = vadd.f32 %v326, %v914
    %v916 = vpop.f32.mrb[0].mxu0
    %v917 = vpop.f32.mrb[0].mxu0
    %v918 = vpop.f32.mrb[0].mxu0
    %919 = vdwg.mxu0
    %v921 = vrot.slane %v915, 2
    %v923 = vadd.f32 %v312, %v921
    %v924 = vxor.u32 %v923, 2147483648
    %v925 = vmul.f32 %v924, 1.442695
    %v926 = vpow.pop %v925
    %v927 = vadd.f32 %v926, 1.0
    %v928 = vrcp.pop %v927
    %v929 = vmul.f32 1.0, %v928
    %930 = vrot.lane.b32.xlu0 %v921, 96
    %v931 = vpop.permute.xlu0 %930
    %v933 = vmul.f32 %v929, %v931
    %935 = vrot.lane.b32.xlu0 %v933, 32
    %v936 = vpop.permute.xlu0 %935
    %v938 = vadd.f32 %v312, %v936
    %v939 = vtanh.pop %v938
    %v940 = vsub.f32 1.0, %v929
    %942 = vrot.lane.b32.xlu0 %v939, 112
    %v943 = vpop.permute.xlu0 %942
    %v945 = vmul.f32 %v940, %v943
    %v947 = vrot.slane %v871, 6
    %v949 = vmul.f32 %v929, %v947
    %v950 = vadd.f32 %v945, %v949
    %v951 = vpack.c.bf16 %v950, %v950
    %v953 = vrot.slane %v951, 3
    %954 = vrot.lane.b32.xlu0 %v953, 112
    %v955 = vpop.permute.xlu0 %954
    %v957 = vsel %vm173, %v955, 0
    %959 = vmatprep.subr.bf16.mxu0 0
    %960 = vmatpush1.bf16.msra.mxu0 %v331
    %961 = vmatprep.subr.bf16.mxu0 0
    %962 = vmatpush1.bf16.msra.mxu0 0
    %963 = vmatprep.subr.bf16.mxu0 0
    %964 = vmatpush1.bf16.msra.mxu0 0
    %965 = vmatprep.subr.bf16.mxu0 0
    %966 = vmatpush1.bf16.msra.mxu0 0
    %967 = vmatprep.subr.bf16.mxu0 0
    %968 = vmatpush1.bf16.msra.mxu0 0
    %969 = vmatprep.subr.bf16.mxu0 0
    %970 = vmatpush1.bf16.msra.mxu0 0
    %971 = vmatprep.subr.bf16.mxu0 0
    %972 = vmatpush1.bf16.msra.mxu0 0
    %973 = vmatprep.subr.bf16.mxu0 0
    %974 = vmatpush1.bf16.msra.mxu0 0
    %975 = vmatprep.subr.bf16.mxu0 0
    %976 = vmatpush1.bf16.msra.mxu0 0
    %977 = vmatprep.subr.bf16.mxu0 0
    %978 = vmatpush1.bf16.msra.mxu0 0
    %979 = vmatprep.subr.bf16.mxu0 0
    %980 = vmatpush1.bf16.msra.mxu0 0
    %981 = vmatprep.subr.bf16.mxu0 0
    %982 = vmatpush1.bf16.msra.mxu0 0
    %983 = vmatprep.subr.bf16.mxu0 0
    %984 = vmatpush1.bf16.msra.mxu0 0
    %985 = vmatprep.subr.bf16.mxu0 0
    %986 = vmatpush1.bf16.msra.mxu0 0
    %987 = vmatprep.subr.bf16.mxu0 0
    %988 = vmatpush1.bf16.msra.mxu0 0
    %989 = vmatprep.subr.bf16.mxu0 0
    %990 = vmatpush1.bf16.msra.mxu0 0
    %991 = vmatprep.mubr.bf16.mxu0 0
    %992 = vmatmul.mubr.bf16.gmra.mrb[0].mxu0 %v957
    %v993 = vpop.f32.mrb[0].mxu0
    %v994 = vadd.f32 %v326, %v993
    %v995 = vpop.f32.mrb[0].mxu0
    %v996 = vpop.f32.mrb[0].mxu0
    %v997 = vpop.f32.mrb[0].mxu0
    %998 = vdwg.mxu0
    %v999 = vadd.f32 %v317, %v994
    %v1000 = vxor.u32 %v999, 2147483648
    %v1001 = vmul.f32 %v1000, 1.442695
    %v1002 = vpow.pop %v1001
    %v1003 = vadd.f32 %v1002, 1.0
    %v1004 = vrcp.pop %v1003
    %v1005 = vmul.f32 1.0, %v1004
    %1007 = vrot.lane.b32.xlu0 %v994, 96
    %v1008 = vpop.permute.xlu0 %1007
    %v1010 = vmul.f32 %v1005, %v1008
    %1012 = vrot.lane.b32.xlu0 %v1010, 32
    %v1013 = vpop.permute.xlu0 %1012
    %v1015 = vadd.f32 %v317, %v1013
    %v1016 = vtanh.pop %v1015
    %v1017 = vsub.f32 1.0, %v1005
    %1019 = vrot.lane.b32.xlu0 %v1016, 112
    %v1020 = vpop.permute.xlu0 %1019
    %v1022 = vmul.f32 %v1017, %v1020
    %v1024 = vrot.slane %v950, 6
    %v1026 = vmul.f32 %v1005, %v1024
    %v1027 = vadd.f32 %v1022, %v1026
    %v1028 = vpack.c.bf16 %v1027, %v1027
    %1030 = vrot.lane.b32.xlu0 %v1028, 112
    %v1031 = vpop.permute.xlu0 %1030
    %v1033 = vsel %vm173, %v1031, 0
    %1035 = vmatprep.subr.bf16.mxu0 0
    %1036 = vmatpush1.bf16.msra.mxu0 %v331
    %1037 = vmatprep.subr.bf16.mxu0 0
    %1038 = vmatpush1.bf16.msra.mxu0 0
    %1039 = vmatprep.subr.bf16.mxu0 0
    %1040 = vmatpush1.bf16.msra.mxu0 0
    %1041 = vmatprep.subr.bf16.mxu0 0
    %1042 = vmatpush1.bf16.msra.mxu0 0
    %1043 = vmatprep.subr.bf16.mxu0 0
    %1044 = vmatpush1.bf16.msra.mxu0 0
    %1045 = vmatprep.subr.bf16.mxu0 0
    %1046 = vmatpush1.bf16.msra.mxu0 0
    %1047 = vmatprep.subr.bf16.mxu0 0
    %1048 = vmatpush1.bf16.msra.mxu0 0
    %1049 = vmatprep.subr.bf16.mxu0 0
    %1050 = vmatpush1.bf16.msra.mxu0 0
    %1051 = vmatprep.subr.bf16.mxu0 0
    %1052 = vmatpush1.bf16.msra.mxu0 0
    %1053 = vmatprep.subr.bf16.mxu0 0
    %1054 = vmatpush1.bf16.msra.mxu0 0
    %1055 = vmatprep.subr.bf16.mxu0 0
    %1056 = vmatpush1.bf16.msra.mxu0 0
    %1057 = vmatprep.subr.bf16.mxu0 0
    %1058 = vmatpush1.bf16.msra.mxu0 0
    %1059 = vmatprep.subr.bf16.mxu0 0
    %1060 = vmatpush1.bf16.msra.mxu0 0
    %1061 = vmatprep.subr.bf16.mxu0 0
    %1062 = vmatpush1.bf16.msra.mxu0 0
    %1063 = vmatprep.subr.bf16.mxu0 0
    %1064 = vmatpush1.bf16.msra.mxu0 0
    %1065 = vmatprep.subr.bf16.mxu0 0
    %1066 = vmatpush1.bf16.msra.mxu0 0
    %1067 = vmatprep.mubr.bf16.mxu0 0
    %1068 = vmatmul.mubr.bf16.gmra.mrb[0].mxu0 %v1033
    %v1069 = vpop.f32.mrb[0].mxu0
    %v1070 = vadd.f32 %v326, %v1069
    %v1071 = vpop.f32.mrb[0].mxu0
    %v1072 = vpop.f32.mrb[0].mxu0
    %v1073 = vpop.f32.mrb[0].mxu0
    %1074 = vdwg.mxu0
    %v1076 = vrot.slane %v1070, 6
    %v1078 = vadd.f32 %v317, %v1076
    %v1079 = vxor.u32 %v1078, 2147483648
    %v1080 = vmul.f32 %v1079, 1.442695
    %v1081 = vpow.pop %v1080
    %v1082 = vadd.f32 %v1081, 1.0
    %v1083 = vrcp.pop %v1082
    %v1084 = vmul.f32 1.0, %v1083
    %1085 = vrot.lane.b32.xlu0 %v1076, 96
    %v1086 = vpop.permute.xlu0 %1085
    %v1088 = vmul.f32 %v1084, %v1086
    %1090 = vrot.lane.b32.xlu0 %v1088, 32
    %v1091 = vpop.permute.xlu0 %1090
    %v1093 = vadd.f32 %v317, %v1091
    %v1094 = vtanh.pop %v1093
    %v1095 = vsub.f32 1.0, %v1084
    %1097 = vrot.lane.b32.xlu0 %v1094, 112
    %v1098 = vpop.permute.xlu0 %1097
    %v1100 = vmul.f32 %v1095, %v1098
    %v1102 = vrot.slane %v1027, 6
    %v1104 = vmul.f32 %v1084, %v1102
    %v1105 = vadd.f32 %v1100, %v1104
    %v1106 = vpack.c.bf16 %v1105, %v1105
    %v1108 = vrot.slane %v1106, 1
    %1109 = vrot.lane.b32.xlu0 %v1108, 112
    %v1110 = vpop.permute.xlu0 %1109
    %v1112 = vsel %vm173, %v1110, 0
    %1114 = vmatprep.subr.bf16.mxu0 0
    %1115 = vmatpush1.bf16.msra.mxu0 %v331
    %1116 = vmatprep.subr.bf16.mxu0 0
    %1117 = vmatpush1.bf16.msra.mxu0 0
    %1118 = vmatprep.subr.bf16.mxu0 0
    %1119 = vmatpush1.bf16.msra.mxu0 0
    %1120 = vmatprep.subr.bf16.mxu0 0
    %1121 = vmatpush1.bf16.msra.mxu0 0
    %1122 = vmatprep.subr.bf16.mxu0 0
    %1123 = vmatpush1.bf16.msra.mxu0 0
    %1124 = vmatprep.subr.bf16.mxu0 0
    %1125 = vmatpush1.bf16.msra.mxu0 0
    %1126 = vmatprep.subr.bf16.mxu0 0
    %1127 = vmatpush1.bf16.msra.mxu0 0
    %1128 = vmatprep.subr.bf16.mxu0 0
    %1129 = vmatpush1.bf16.msra.mxu0 0
    %1130 = vmatprep.subr.bf16.mxu0 0
    %1131 = vmatpush1.bf16.msra.mxu0 0
    %1132 = vmatprep.subr.bf16.mxu0 0
    %1133 = vmatpush1.bf16.msra.mxu0 0
    %1134 = vmatprep.subr.bf16.mxu0 0
    %1135 = vmatpush1.bf16.msra.mxu0 0
    %1136 = vmatprep.subr.bf16.mxu0 0
    %1137 = vmatpush1.bf16.msra.mxu0 0
    %1138 = vmatprep.subr.bf16.mxu0 0
    %1139 = vmatpush1.bf16.msra.mxu0 0
    %1140 = vmatprep.subr.bf16.mxu0 0
    %1141 = vmatpush1.bf16.msra.mxu0 0
    %1142 = vmatprep.subr.bf16.mxu0 0
    %1143 = vmatpush1.bf16.msra.mxu0 0
    %1144 = vmatprep.subr.bf16.mxu0 0
    %1145 = vmatpush1.bf16.msra.mxu0 0
    %1146 = vmatprep.mubr.bf16.mxu0 0
    %1147 = vmatmul.mubr.bf16.gmra.mrb[0].mxu0 %v1112
    %v1148 = vpop.f32.mrb[0].mxu0
    %v1149 = vadd.f32 %v326, %v1148
    %v1150 = vpop.f32.mrb[0].mxu0
    %v1151 = vpop.f32.mrb[0].mxu0
    %v1152 = vpop.f32.mrb[0].mxu0
    %1153 = vdwg.mxu0
    %v1155 = vrot.slane %v1149, 4
    %v1157 = vadd.f32 %v317, %v1155
    %v1158 = vxor.u32 %v1157, 2147483648
    %v1159 = vmul.f32 %v1158, 1.442695
    %v1160 = vpow.pop %v1159
    %v1161 = vadd.f32 %v1160, 1.0
    %v1162 = vrcp.pop %v1161
    %v1163 = vmul.f32 1.0, %v1162
    %1164 = vrot.lane.b32.xlu0 %v1155, 96
    %v1165 = vpop.permute.xlu0 %1164
    %v1167 = vmul.f32 %v1163, %v1165
    %1169 = vrot.lane.b32.xlu0 %v1167, 32
    %v1170 = vpop.permute.xlu0 %1169
    %v1172 = vadd.f32 %v317, %v1170
    %v1173 = vtanh.pop %v1172
    %v1174 = vsub.f32 1.0, %v1163
    %1176 = vrot.lane.b32.xlu0 %v1173, 112
    %v1177 = vpop.permute.xlu0 %1176
    %v1179 = vmul.f32 %v1174, %v1177
    %v1181 = vrot.slane %v1105, 6
    %v1183 = vmul.f32 %v1163, %v1181
    %v1184 = vadd.f32 %v1179, %v1183
    %v1185 = vpack.c.bf16 %v1184, %v1184
    %v1187 = vrot.slane %v1185, 2
    %1188 = vrot.lane.b32.xlu0 %v1187, 112
    %v1189 = vpop.permute.xlu0 %1188
    %v1191 = vsel %vm173, %v1189, 0
    %1193 = vmatprep.subr.bf16.mxu0 0
    %1194 = vmatpush1.bf16.msra.mxu0 %v331
    %1195 = vmatprep.subr.bf16.mxu0 0
    %1196 = vmatpush1.bf16.msra.mxu0 0
    %1197 = vmatprep.subr.bf16.mxu0 0
    %1198 = vmatpush1.bf16.msra.mxu0 0
    %1199 = vmatprep.subr.bf16.mxu0 0
    %1200 = vmatpush1.bf16.msra.mxu0 0
    %1201 = vmatprep.subr.bf16.mxu0 0
    %1202 = vmatpush1.bf16.msra.mxu0 0
    %1203 = vmatprep.subr.bf16.mxu0 0
    %1204 = vmatpush1.bf16.msra.mxu0 0
    %1205 = vmatprep.subr.bf16.mxu0 0
    %1206 = vmatpush1.bf16.msra.mxu0 0
    %1207 = vmatprep.subr.bf16.mxu0 0
    %1208 = vmatpush1.bf16.msra.mxu0 0
    %1209 = vmatprep.subr.bf16.mxu0 0
    %1210 = vmatpush1.bf16.msra.mxu0 0
    %1211 = vmatprep.subr.bf16.mxu0 0
    %1212 = vmatpush1.bf16.msra.mxu0 0
    %1213 = vmatprep.subr.bf16.mxu0 0
    %1214 = vmatpush1.bf16.msra.mxu0 0
    %1215 = vmatprep.subr.bf16.mxu0 0
    %1216 = vmatpush1.bf16.msra.mxu0 0
    %1217 = vmatprep.subr.bf16.mxu0 0
    %1218 = vmatpush1.bf16.msra.mxu0 0
    %1219 = vmatprep.subr.bf16.mxu0 0
    %1220 = vmatpush1.bf16.msra.mxu0 0
    %1221 = vmatprep.subr.bf16.mxu0 0
    %1222 = vmatpush1.bf16.msra.mxu0 0
    %1223 = vmatprep.subr.bf16.mxu0 0
    %1224 = vmatpush1.bf16.msra.mxu0 0
    %1225 = vmatprep.mubr.bf16.mxu0 0
    %1226 = vmatmul.mubr.bf16.gmra.mrb[0].mxu0 %v1191
    %v1227 = vpop.f32.mrb[0].mxu0
    %v1228 = vadd.f32 %v326, %v1227
    %v1229 = vpop.f32.mrb[0].mxu0
    %v1230 = vpop.f32.mrb[0].mxu0
    %v1231 = vpop.f32.mrb[0].mxu0
    %1232 = vdwg.mxu0
    %v1234 = vrot.slane %v1228, 2
    %v1236 = vadd.f32 %v317, %v1234
    %v1237 = vxor.u32 %v1236, 2147483648
    %v1238 = vmul.f32 %v1237, 1.442695
    %v1239 = vpow.pop %v1238
    %v1240 = vadd.f32 %v1239, 1.0
    %v1241 = vrcp.pop %v1240
    %v1242 = vmul.f32 1.0, %v1241
    %1243 = vrot.lane.b32.xlu0 %v1234, 96
    %v1244 = vpop.permute.xlu0 %1243
    %v1246 = vmul.f32 %v1242, %v1244
    %1248 = vrot.lane.b32.xlu0 %v1246, 32
    %v1249 = vpop.permute.xlu0 %1248
    %v1251 = vadd.f32 %v317, %v1249
    %v1252 = vtanh.pop %v1251
    %v1253 = vsub.f32 1.0, %v1242
    %1255 = vrot.lane.b32.xlu0 %v1252, 112
    %v1256 = vpop.permute.xlu0 %1255
    %v1258 = vmul.f32 %v1253, %v1256
    %v1260 = vrot.slane %v1184, 6
    %v1262 = vmul.f32 %v1242, %v1260
    %v1263 = vadd.f32 %v1258, %v1262
    %v1264 = vpack.c.bf16 %v1263, %v1263
    %v1266 = vrot.slane %v1264, 3
    %1267 = vrot.lane.b32.xlu0 %v1266, 112
    %v1268 = vpop.permute.xlu0 %1267
    %v1270 = vsel %vm173, %v1268, 0
    %1272 = vmatprep.subr.bf16.mxu0 0
    %1273 = vmatpush1.bf16.msra.mxu0 %v331
    %1274 = vmatprep.subr.bf16.mxu0 0
    %1275 = vmatpush1.bf16.msra.mxu0 0
    %1276 = vmatprep.subr.bf16.mxu0 0
    %1277 = vmatpush1.bf16.msra.mxu0 0
    %1278 = vmatprep.subr.bf16.mxu0 0
    %1279 = vmatpush1.bf16.msra.mxu0 0
    %1280 = vmatprep.subr.bf16.mxu0 0
    %1281 = vmatpush1.bf16.msra.mxu0 0
    %1282 = vmatprep.subr.bf16.mxu0 0
    %1283 = vmatpush1.bf16.msra.mxu0 0
    %1284 = vmatprep.subr.bf16.mxu0 0
    %1285 = vmatpush1.bf16.msra.mxu0 0
    %1286 = vmatprep.subr.bf16.mxu0 0
    %1287 = vmatpush1.bf16.msra.mxu0 0
    %1288 = vmatprep.subr.bf16.mxu0 0
    %1289 = vmatpush1.bf16.msra.mxu0 0
    %1290 = vmatprep.subr.bf16.mxu0 0
    %1291 = vmatpush1.bf16.msra.mxu0 0
    %1292 = vmatprep.subr.bf16.mxu0 0
    %1293 = vmatpush1.bf16.msra.mxu0 0
    %1294 = vmatprep.subr.bf16.mxu0 0
    %1295 = vmatpush1.bf16.msra.mxu0 0
    %1296 = vmatprep.subr.bf16.mxu0 0
    %1297 = vmatpush1.bf16.msra.mxu0 0
    %1298 = vmatprep.subr.bf16.mxu0 0
    %1299 = vmatpush1.bf16.msra.mxu0 0
    %1300 = vmatprep.subr.bf16.mxu0 0
    %1301 = vmatpush1.bf16.msra.mxu0 0
    %1302 = vmatprep.subr.bf16.mxu0 0
    %1303 = vmatpush1.bf16.msra.mxu0 0
    %1304 = vmatprep.mubr.bf16.mxu0 0
    %1305 = vmatmul.mubr.bf16.gmra.mrb[0].mxu0 %v1270
    %v1306 = vpop.f32.mrb[0].mxu0
    %v1307 = vadd.f32 %v326, %v1306
    %v1308 = vpop.f32.mrb[0].mxu0
    %v1309 = vpop.f32.mrb[0].mxu0
    %v1310 = vpop.f32.mrb[0].mxu0
    %1311 = vdwg.mxu0
    %v1312 = vadd.f32 %v320, %v1307
    %v1313 = vxor.u32 %v1312, 2147483648
    %v1314 = vmul.f32 %v1313, 1.442695
    %v1315 = vpow.pop %v1314
    %v1316 = vadd.f32 %v1315, 1.0
    %v1317 = vrcp.pop %v1316
    %v1318 = vmul.f32 1.0, %v1317
    %1320 = vrot.lane.b32.xlu0 %v1307, 96
    %v1321 = vpop.permute.xlu0 %1320
    %v1323 = vmul.f32 %v1318, %v1321
    %1325 = vrot.lane.b32.xlu0 %v1323, 32
    %v1326 = vpop.permute.xlu0 %1325
    %v1328 = vadd.f32 %v320, %v1326
    %v1329 = vtanh.pop %v1328
    %v1330 = vsub.f32 1.0, %v1318
    %1332 = vrot.lane.b32.xlu0 %v1329, 112
    %v1333 = vpop.permute.xlu0 %1332
    %v1335 = vmul.f32 %v1330, %v1333
    %v1337 = vrot.slane %v1263, 6
    %v1339 = vmul.f32 %v1318, %v1337
    %v1340 = vadd.f32 %v1335, %v1339
    %v1341 = vpack.c.bf16 %v1340, %v1340
    %1343 = vrot.lane.b32.xlu0 %v1341, 112
    %v1344 = vpop.permute.xlu0 %1343
    %v1346 = vsel %vm173, %v1344, 0
    %1348 = vmatprep.subr.bf16.mxu0 0
    %1349 = vmatpush1.bf16.msra.mxu0 %v331
    %1350 = vmatprep.subr.bf16.mxu0 0
    %1351 = vmatpush1.bf16.msra.mxu0 0
    %1352 = vmatprep.subr.bf16.mxu0 0
    %1353 = vmatpush1.bf16.msra.mxu0 0
    %1354 = vmatprep.subr.bf16.mxu0 0
    %1355 = vmatpush1.bf16.msra.mxu0 0
    %1356 = vmatprep.subr.bf16.mxu0 0
    %1357 = vmatpush1.bf16.msra.mxu0 0
    %1358 = vmatprep.subr.bf16.mxu0 0
    %1359 = vmatpush1.bf16.msra.mxu0 0
    %1360 = vmatprep.subr.bf16.mxu0 0
    %1361 = vmatpush1.bf16.msra.mxu0 0
    %1362 = vmatprep.subr.bf16.mxu0 0
    %1363 = vmatpush1.bf16.msra.mxu0 0
    %1364 = vmatprep.subr.bf16.mxu0 0
    %1365 = vmatpush1.bf16.msra.mxu0 0
    %1366 = vmatprep.subr.bf16.mxu0 0
    %1367 = vmatpush1.bf16.msra.mxu0 0
    %1368 = vmatprep.subr.bf16.mxu0 0
    %1369 = vmatpush1.bf16.msra.mxu0 0
    %1370 = vmatprep.subr.bf16.mxu0 0
    %1371 = vmatpush1.bf16.msra.mxu0 0
    %1372 = vmatprep.subr.bf16.mxu0 0
    %1373 = vmatpush1.bf16.msra.mxu0 0
    %1374 = vmatprep.subr.bf16.mxu0 0
    %1375 = vmatpush1.bf16.msra.mxu0 0
    %1376 = vmatprep.subr.bf16.mxu0 0
    %1377 = vmatpush1.bf16.msra.mxu0 0
    %1378 = vmatprep.subr.bf16.mxu0 0
    %1379 = vmatpush1.bf16.msra.mxu0 0
    %1380 = vmatprep.mubr.bf16.mxu0 0
    %1381 = vmatmul.mubr.bf16.gmra.mrb[0].mxu0 %v1346
    %v1382 = vpop.f32.mrb[0].mxu0
    %v1383 = vadd.f32 %v326, %v1382
    %v1384 = vpop.f32.mrb[0].mxu0
    %v1385 = vpop.f32.mrb[0].mxu0
    %v1386 = vpop.f32.mrb[0].mxu0
    %1387 = vdwg.mxu0
    %v1389 = vrot.slane %v1383, 6
    %v1391 = vadd.f32 %v320, %v1389
    %v1392 = vxor.u32 %v1391, 2147483648
    %v1393 = vmul.f32 %v1392, 1.442695
    %v1394 = vpow.pop %v1393
    %v1395 = vadd.f32 %v1394, 1.0
    %v1396 = vrcp.pop %v1395
    %v1397 = vmul.f32 1.0, %v1396
    %1398 = vrot.lane.b32.xlu0 %v1389, 96
    %v1399 = vpop.permute.xlu0 %1398
    %v1401 = vmul.f32 %v1397, %v1399
    %1403 = vrot.lane.b32.xlu0 %v1401, 32
    %v1404 = vpop.permute.xlu0 %1403
    %v1406 = vadd.f32 %v320, %v1404
    %v1407 = vtanh.pop %v1406
    %v1408 = vsub.f32 1.0, %v1397
    %1410 = vrot.lane.b32.xlu0 %v1407, 112
    %v1411 = vpop.permute.xlu0 %1410
    %v1413 = vmul.f32 %v1408, %v1411
    %v1415 = vrot.slane %v1340, 6
    %v1417 = vmul.f32 %v1397, %v1415
    %v1418 = vadd.f32 %v1413, %v1417
    %v1419 = vlaneseq
    %v1420 = vshrl.u32 %v1419, 7
    %v1421 = vsub.s32 0, %v1420
    %v1422 = vrot.slane %v49, %v1421
    %v1423 = vsel %vm168, 0, 0
    %v1426 = vsel %vm148, %v41, 0
    %1428 = vmatprep.subr.bf16.mxu0 0
    %1429 = vmatpush1.bf16.msra.mxu0 %v1426
    %1430 = vmatprep.subr.bf16.mxu0 0
    %1431 = vmatpush1.bf16.msra.mxu0 0
    %1432 = vmatprep.subr.bf16.mxu0 0
    %1433 = vmatpush1.bf16.msra.mxu0 0
    %1434 = vmatprep.subr.bf16.mxu0 0
    %1435 = vmatpush1.bf16.msra.mxu0 0
    %1436 = vmatprep.subr.bf16.mxu0 0
    %1437 = vmatpush1.bf16.msra.mxu0 0
    %1438 = vmatprep.subr.bf16.mxu0 0
    %1439 = vmatpush1.bf16.msra.mxu0 0
    %1440 = vmatprep.subr.bf16.mxu0 0
    %1441 = vmatpush1.bf16.msra.mxu0 0
    %1442 = vmatprep.subr.bf16.mxu0 0
    %1443 = vmatpush1.bf16.msra.mxu0 0
    %1444 = vmatprep.subr.bf16.mxu0 0
    %1445 = vmatpush1.bf16.msra.mxu0 0
    %1446 = vmatprep.subr.bf16.mxu0 0
    %1447 = vmatpush1.bf16.msra.mxu0 0
    %1448 = vmatprep.subr.bf16.mxu0 0
    %1449 = vmatpush1.bf16.msra.mxu0 0
    %1450 = vmatprep.subr.bf16.mxu0 0
    %1451 = vmatpush1.bf16.msra.mxu0 0
    %1452 = vmatprep.subr.bf16.mxu0 0
    %1453 = vmatpush1.bf16.msra.mxu0 0
    %1454 = vmatprep.subr.bf16.mxu0 0
    %1455 = vmatpush1.bf16.msra.mxu0 0
    %1456 = vmatprep.subr.bf16.mxu0 0
    %1457 = vmatpush1.bf16.msra.mxu0 0
    %1458 = vmatprep.subr.bf16.mxu0 0
    %1459 = vmatpush1.bf16.msra.mxu0 0
    %1460 = vmatprep.mubr.bf16.mxu0 0
    %1461 = vmatmul.mubr.bf16.gmra.mrb[0].mxu0 %v1423
    %v1462 = vpop.f32.mrb[0].mxu0
    %v1463 = vadd.f32 %v1422, %v1462
    %v1464 = vpop.f32.mrb[0].mxu0
    %v1465 = vpop.f32.mrb[0].mxu0
    %v1466 = vpop.f32.mrb[0].mxu0
    %1467 = vdwg.mxu0
    %v1469 = vrot.slane %v1463, 4
    %1470 = vrot.lane.b32.xlu0 %v1469, 48
    %v1471 = vpop.permute.xlu0 %1470
    %v1473 = vadd.f32 %v309, %v1471
    %v1474 = vxor.u32 %v1473, 2147483648
    %v1475 = vmul.f32 %v1474, 1.442695
    %v1476 = vpow.pop %v1475
    %v1477 = vadd.f32 %v1476, 1.0
    %v1478 = vrcp.pop %v1477
    %v1479 = vmul.f32 1.0, %v1478
    %1480 = vrot.lane.b32.xlu0 %v1469, 32
    %v1481 = vpop.permute.xlu0 %1480
    %v1483 = vmul.f32 %v1479, %v1481
    %1485 = vrot.lane.b32.xlu0 %v1483, 16
    %v1486 = vpop.permute.xlu0 %1485
    %v1488 = vadd.f32 %v309, %v1486
    %v1489 = vtanh.pop %v1488
    %v1490 = vsub.f32 1.0, %v1479
    %1492 = vrot.lane.b32.xlu0 %v1489, 120
    %v1493 = vpop.permute.xlu0 %1492
    %v1495 = vmul.f32 %v1490, %v1493
    %v1496 = vmul.f32 %v1479, 0.0
    %v1497 = vadd.f32 %v1495, %v1496
    %v1498 = vpack.c.bf16 %v1497, %v1497
    %v1500 = vrot.slane %v1498, 2
    %1501 = vrot.lane.b32.xlu0 %v1500, 72
    %v1502 = vpop.permute.xlu0 %1501
    %v1504 = vsel %vm168, %v1502, 0
    %1506 = vmatprep.subr.bf16.mxu0 0
    %1507 = vmatpush1.bf16.msra.mxu0 %v1426
    %1508 = vmatprep.subr.bf16.mxu0 0
    %1509 = vmatpush1.bf16.msra.mxu0 0
    %1510 = vmatprep.subr.bf16.mxu0 0
    %1511 = vmatpush1.bf16.msra.mxu0 0
    %1512 = vmatprep.subr.bf16.mxu0 0
    %1513 = vmatpush1.bf16.msra.mxu0 0
    %1514 = vmatprep.subr.bf16.mxu0 0
    %1515 = vmatpush1.bf16.msra.mxu0 0
    %1516 = vmatprep.subr.bf16.mxu0 0
    %1517 = vmatpush1.bf16.msra.mxu0 0
    %1518 = vmatprep.subr.bf16.mxu0 0
    %1519 = vmatpush1.bf16.msra.mxu0 0
    %1520 = vmatprep.subr.bf16.mxu0 0
    %1521 = vmatpush1.bf16.msra.mxu0 0
    %1522 = vmatprep.subr.bf16.mxu0 0
    %1523 = vmatpush1.bf16.msra.mxu0 0
    %1524 = vmatprep.subr.bf16.mxu0 0
    %1525 = vmatpush1.bf16.msra.mxu0 0
    %1526 = vmatprep.subr.bf16.mxu0 0
    %1527 = vmatpush1.bf16.msra.mxu0 0
    %1528 = vmatprep.subr.bf16.mxu0 0
    %1529 = vmatpush1.bf16.msra.mxu0 0
    %1530 = vmatprep.subr.bf16.mxu0 0
    %1531 = vmatpush1.bf16.msra.mxu0 0
    %1532 = vmatprep.subr.bf16.mxu0 0
    %1533 = vmatpush1.bf16.msra.mxu0 0
    %1534 = vmatprep.subr.bf16.mxu0 0
    %1535 = vmatpush1.bf16.msra.mxu0 0
    %1536 = vmatprep.subr.bf16.mxu0 0
    %1537 = vmatpush1.bf16.msra.mxu0 0
    %1538 = vmatprep.mubr.bf16.mxu0 0
    %1539 = vmatmul.mubr.bf16.gmra.mrb[0].mxu0 %v1504
    %v1540 = vpop.f32.mrb[0].mxu0
    %v1541 = vadd.f32 %v1422, %v1540
    %v1542 = vpop.f32.mrb[0].mxu0
    %v1543 = vpop.f32.mrb[0].mxu0
    %v1544 = vpop.f32.mrb[0].mxu0
    %1545 = vdwg.mxu0
    %1547 = vrot.lane.b32.xlu0 %v1541, 48
    %v1548 = vpop.permute.xlu0 %1547
    %v1550 = vadd.f32 %v312, %v1548
    %v1551 = vxor.u32 %v1550, 2147483648
    %v1552 = vmul.f32 %v1551, 1.442695
    %v1553 = vpow.pop %v1552
    %v1554 = vadd.f32 %v1553, 1.0
    %v1555 = vrcp.pop %v1554
    %v1556 = vmul.f32 1.0, %v1555
    %1557 = vrot.lane.b32.xlu0 %v1541, 32
    %v1558 = vpop.permute.xlu0 %1557
    %v1560 = vmul.f32 %v1556, %v1558
    %1562 = vrot.lane.b32.xlu0 %v1560, 16
    %v1563 = vpop.permute.xlu0 %1562
    %v1565 = vadd.f32 %v312, %v1563
    %v1566 = vtanh.pop %v1565
    %v1567 = vsub.f32 1.0, %v1556
    %1569 = vrot.lane.b32.xlu0 %v1566, 120
    %v1570 = vpop.permute.xlu0 %1569
    %v1572 = vmul.f32 %v1567, %v1570
    %v1574 = vrot.slane %v1497, 4
    %v1576 = vmul.f32 %v1556, %v1574
    %v1577 = vadd.f32 %v1572, %v1576
    %v1578 = vpack.c.bf16 %v1577, %v1577
    %1580 = vrot.lane.b32.xlu0 %v1578, 72
    %v1581 = vpop.permute.xlu0 %1580
    %v1583 = vsel %vm168, %v1581, 0
    %1585 = vmatprep.subr.bf16.mxu0 0
    %1586 = vmatpush1.bf16.msra.mxu0 %v1426
    %1587 = vmatprep.subr.bf16.mxu0 0
    %1588 = vmatpush1.bf16.msra.mxu0 0
    %1589 = vmatprep.subr.bf16.mxu0 0
    %1590 = vmatpush1.bf16.msra.mxu0 0
    %1591 = vmatprep.subr.bf16.mxu0 0
    %1592 = vmatpush1.bf16.msra.mxu0 0
    %1593 = vmatprep.subr.bf16.mxu0 0
    %1594 = vmatpush1.bf16.msra.mxu0 0
    %1595 = vmatprep.subr.bf16.mxu0 0
    %1596 = vmatpush1.bf16.msra.mxu0 0
    %1597 = vmatprep.subr.bf16.mxu0 0
    %1598 = vmatpush1.bf16.msra.mxu0 0
    %1599 = vmatprep.subr.bf16.mxu0 0
    %1600 = vmatpush1.bf16.msra.mxu0 0
    %1601 = vmatprep.subr.bf16.mxu0 0
    %1602 = vmatpush1.bf16.msra.mxu0 0
    %1603 = vmatprep.subr.bf16.mxu0 0
    %1604 = vmatpush1.bf16.msra.mxu0 0
    %1605 = vmatprep.subr.bf16.mxu0 0
    %1606 = vmatpush1.bf16.msra.mxu0 0
    %1607 = vmatprep.subr.bf16.mxu0 0
    %1608 = vmatpush1.bf16.msra.mxu0 0
    %1609 = vmatprep.subr.bf16.mxu0 0
    %1610 = vmatpush1.bf16.msra.mxu0 0
    %1611 = vmatprep.subr.bf16.mxu0 0
    %1612 = vmatpush1.bf16.msra.mxu0 0
    %1613 = vmatprep.subr.bf16.mxu0 0
    %1614 = vmatpush1.bf16.msra.mxu0 0
    %1615 = vmatprep.subr.bf16.mxu0 0
    %1616 = vmatpush1.bf16.msra.mxu0 0
    %1617 = vmatprep.mubr.bf16.mxu0 0
    %1618 = vmatmul.mubr.bf16.gmra.mrb[0].mxu0 %v1583
    %v1619 = vpop.f32.mrb[0].mxu0
    %v1620 = vadd.f32 %v1422, %v1619
    %v1621 = vpop.f32.mrb[0].mxu0
    %v1622 = vpop.f32.mrb[0].mxu0
    %v1623 = vpop.f32.mrb[0].mxu0
    %1624 = vdwg.mxu0
    %v1626 = vrot.slane %v1620, 4
    %1627 = vrot.lane.b32.xlu0 %v1626, 48
    %v1628 = vpop.permute.xlu0 %1627
    %v1630 = vadd.f32 %v312, %v1628
    %v1631 = vxor.u32 %v1630, 2147483648
    %v1632 = vmul.f32 %v1631, 1.442695
    %v1633 = vpow.pop %v1632
    %v1634 = vadd.f32 %v1633, 1.0
    %v1635 = vrcp.pop %v1634
    %v1636 = vmul.f32 1.0, %v1635
    %1637 = vrot.lane.b32.xlu0 %v1626, 32
    %v1638 = vpop.permute.xlu0 %1637
    %v1640 = vmul.f32 %v1636, %v1638
    %1642 = vrot.lane.b32.xlu0 %v1640, 16
    %v1643 = vpop.permute.xlu0 %1642
    %v1645 = vadd.f32 %v312, %v1643
    %v1646 = vtanh.pop %v1645
    %v1647 = vsub.f32 1.0, %v1636
    %1649 = vrot.lane.b32.xlu0 %v1646, 120
    %v1650 = vpop.permute.xlu0 %1649
    %v1652 = vmul.f32 %v1647, %v1650
    %v1654 = vrot.slane %v1577, 4
    %v1656 = vmul.f32 %v1636, %v1654
    %v1657 = vadd.f32 %v1652, %v1656
    %v1658 = vpack.c.bf16 %v1657, %v1657
    %v1660 = vrot.slane %v1658, 2
    %1661 = vrot.lane.b32.xlu0 %v1660, 72
    %v1662 = vpop.permute.xlu0 %1661
    %v1664 = vsel %vm168, %v1662, 0
    %1666 = vmatprep.subr.bf16.mxu0 0
    %1667 = vmatpush1.bf16.msra.mxu0 %v1426
    %1668 = vmatprep.subr.bf16.mxu0 0
    %1669 = vmatpush1.bf16.msra.mxu0 0
    %1670 = vmatprep.subr.bf16.mxu0 0
    %1671 = vmatpush1.bf16.msra.mxu0 0
    %1672 = vmatprep.subr.bf16.mxu0 0
    %1673 = vmatpush1.bf16.msra.mxu0 0
    %1674 = vmatprep.subr.bf16.mxu0 0
    %1675 = vmatpush1.bf16.msra.mxu0 0
    %1676 = vmatprep.subr.bf16.mxu0 0
    %1677 = vmatpush1.bf16.msra.mxu0 0
    %1678 = vmatprep.subr.bf16.mxu0 0
    %1679 = vmatpush1.bf16.msra.mxu0 0
    %1680 = vmatprep.subr.bf16.mxu0 0
    %1681 = vmatpush1.bf16.msra.mxu0 0
    %1682 = vmatprep.subr.bf16.mxu0 0
    %1683 = vmatpush1.bf16.msra.mxu0 0
    %1684 = vmatprep.subr.bf16.mxu0 0
    %1685 = vmatpush1.bf16.msra.mxu0 0
    %1686 = vmatprep.subr.bf16.mxu0 0
    %1687 = vmatpush1.bf16.msra.mxu0 0
    %1688 = vmatprep.subr.bf16.mxu0 0
    %1689 = vmatpush1.bf16.msra.mxu0 0
    %1690 = vmatprep.subr.bf16.mxu0 0
    %1691 = vmatpush1.bf16.msra.mxu0 0
    %1692 = vmatprep.subr.bf16.mxu0 0
    %1693 = vmatpush1.bf16.msra.mxu0 0
    %1694 = vmatprep.subr.bf16.mxu0 0
    %1695 = vmatpush1.bf16.msra.mxu0 0
    %1696 = vmatprep.subr.bf16.mxu0 0
    %1697 = vmatpush1.bf16.msra.mxu0 0
    %1698 = vmatprep.mubr.bf16.mxu0 0
    %1699 = vmatmul.mubr.bf16.gmra.mrb[0].mxu0 %v1664
    %v1700 = vpop.f32.mrb[0].mxu0
    %v1701 = vadd.f32 %v1422, %v1700
    %v1702 = vpop.f32.mrb[0].mxu0
    %v1703 = vpop.f32.mrb[0].mxu0
    %v1704 = vpop.f32.mrb[0].mxu0
    %1705 = vdwg.mxu0
    %1707 = vrot.lane.b32.xlu0 %v1701, 48
    %v1708 = vpop.permute.xlu0 %1707
    %v1710 = vadd.f32 %v317, %v1708
    %v1711 = vxor.u32 %v1710, 2147483648
    %v1712 = vmul.f32 %v1711, 1.442695
    %v1713 = vpow.pop %v1712
    %v1714 = vadd.f32 %v1713, 1.0
    %v1715 = vrcp.pop %v1714
    %v1716 = vmul.f32 1.0, %v1715
    %1717 = vrot.lane.b32.xlu0 %v1701, 32
    %v1718 = vpop.permute.xlu0 %1717
    %v1720 = vmul.f32 %v1716, %v1718
    %1722 = vrot.lane.b32.xlu0 %v1720, 16
    %v1723 = vpop.permute.xlu0 %1722
    %v1725 = vadd.f32 %v317, %v1723
    %v1726 = vtanh.pop %v1725
    %v1727 = vsub.f32 1.0, %v1716
    %1729 = vrot.lane.b32.xlu0 %v1726, 120
    %v1730 = vpop.permute.xlu0 %1729
    %v1732 = vmul.f32 %v1727, %v1730
    %v1734 = vrot.slane %v1657, 4
    %v1736 = vmul.f32 %v1716, %v1734
    %v1737 = vadd.f32 %v1732, %v1736
    %v1738 = vpack.c.bf16 %v1737, %v1737
    %1740 = vrot.lane.b32.xlu0 %v1738, 72
    %v1741 = vpop.permute.xlu0 %1740
    %v1743 = vsel %vm168, %v1741, 0
    %1745 = vmatprep.subr.bf16.mxu0 0
    %1746 = vmatpush1.bf16.msra.mxu0 %v1426
    %1747 = vmatprep.subr.bf16.mxu0 0
    %1748 = vmatpush1.bf16.msra.mxu0 0
    %1749 = vmatprep.subr.bf16.mxu0 0
    %1750 = vmatpush1.bf16.msra.mxu0 0
    %1751 = vmatprep.subr.bf16.mxu0 0
    %1752 = vmatpush1.bf16.msra.mxu0 0
    %1753 = vmatprep.subr.bf16.mxu0 0
    %1754 = vmatpush1.bf16.msra.mxu0 0
    %1755 = vmatprep.subr.bf16.mxu0 0
    %1756 = vmatpush1.bf16.msra.mxu0 0
    %1757 = vmatprep.subr.bf16.mxu0 0
    %1758 = vmatpush1.bf16.msra.mxu0 0
    %1759 = vmatprep.subr.bf16.mxu0 0
    %1760 = vmatpush1.bf16.msra.mxu0 0
    %1761 = vmatprep.subr.bf16.mxu0 0
    %1762 = vmatpush1.bf16.msra.mxu0 0
    %1763 = vmatprep.subr.bf16.mxu0 0
    %1764 = vmatpush1.bf16.msra.mxu0 0
    %1765 = vmatprep.subr.bf16.mxu0 0
    %1766 = vmatpush1.bf16.msra.mxu0 0
    %1767 = vmatprep.subr.bf16.mxu0 0
    %1768 = vmatpush1.bf16.msra.mxu0 0
    %1769 = vmatprep.subr.bf16.mxu0 0
    %1770 = vmatpush1.bf16.msra.mxu0 0
    %1771 = vmatprep.subr.bf16.mxu0 0
    %1772 = vmatpush1.bf16.msra.mxu0 0
    %1773 = vmatprep.subr.bf16.mxu0 0
    %1774 = vmatpush1.bf16.msra.mxu0 0
    %1775 = vmatprep.subr.bf16.mxu0 0
    %1776 = vmatpush1.bf16.msra.mxu0 0
    %1777 = vmatprep.mubr.bf16.mxu0 0
    %1778 = vmatmul.mubr.bf16.gmra.mrb[0].mxu0 %v1743
    %v1779 = vpop.f32.mrb[0].mxu0
    %v1780 = vadd.f32 %v1422, %v1779
    %v1781 = vpop.f32.mrb[0].mxu0
    %v1782 = vpop.f32.mrb[0].mxu0
    %v1783 = vpop.f32.mrb[0].mxu0
    %1784 = vdwg.mxu0
    %v1786 = vrot.slane %v1780, 4
    %1787 = vrot.lane.b32.xlu0 %v1786, 48
    %v1788 = vpop.permute.xlu0 %1787
    %v1790 = vadd.f32 %v317, %v1788
    %v1791 = vxor.u32 %v1790, 2147483648
    %v1792 = vmul.f32 %v1791, 1.442695
    %v1793 = vpow.pop %v1792
    %v1794 = vadd.f32 %v1793, 1.0
    %v1795 = vrcp.pop %v1794
    %v1796 = vmul.f32 1.0, %v1795
    %1797 = vrot.lane.b32.xlu0 %v1786, 32
    %v1798 = vpop.permute.xlu0 %1797
    %v1800 = vmul.f32 %v1796, %v1798
    %1802 = vrot.lane.b32.xlu0 %v1800, 16
    %v1803 = vpop.permute.xlu0 %1802
    %v1805 = vadd.f32 %v317, %v1803
    %v1806 = vtanh.pop %v1805
    %v1807 = vsub.f32 1.0, %v1796
    %1809 = vrot.lane.b32.xlu0 %v1806, 120
    %v1810 = vpop.permute.xlu0 %1809
    %v1812 = vmul.f32 %v1807, %v1810
    %v1814 = vrot.slane %v1737, 4
    %v1816 = vmul.f32 %v1796, %v1814
    %v1817 = vadd.f32 %v1812, %v1816
    %v1818 = vpack.c.bf16 %v1817, %v1817
    %v1820 = vrot.slane %v1818, 2
    %1821 = vrot.lane.b32.xlu0 %v1820, 72
    %v1822 = vpop.permute.xlu0 %1821
    %v1824 = vsel %vm168, %v1822, 0
    %1826 = vmatprep.subr.bf16.mxu0 0
    %1827 = vmatpush1.bf16.msra.mxu0 %v1426
    %1828 = vmatprep.subr.bf16.mxu0 0
    %1829 = vmatpush1.bf16.msra.mxu0 0
    %1830 = vmatprep.subr.bf16.mxu0 0
    %1831 = vmatpush1.bf16.msra.mxu0 0
    %1832 = vmatprep.subr.bf16.mxu0 0
    %1833 = vmatpush1.bf16.msra.mxu0 0
    %1834 = vmatprep.subr.bf16.mxu0 0
    %1835 = vmatpush1.bf16.msra.mxu0 0
    %1836 = vmatprep.subr.bf16.mxu0 0
    %1837 = vmatpush1.bf16.msra.mxu0 0
    %1838 = vmatprep.subr.bf16.mxu0 0
    %1839 = vmatpush1.bf16.msra.mxu0 0
    %1840 = vmatprep.subr.bf16.mxu0 0
    %1841 = vmatpush1.bf16.msra.mxu0 0
    %1842 = vmatprep.subr.bf16.mxu0 0
    %1843 = vmatpush1.bf16.msra.mxu0 0
    %1844 = vmatprep.subr.bf16.mxu0 0
    %1845 = vmatpush1.bf16.msra.mxu0 0
    %1846 = vmatprep.subr.bf16.mxu0 0
    %1847 = vmatpush1.bf16.msra.mxu0 0
    %1848 = vmatprep.subr.bf16.mxu0 0
    %1849 = vmatpush1.bf16.msra.mxu0 0
    %1850 = vmatprep.subr.bf16.mxu0 0
    %1851 = vmatpush1.bf16.msra.mxu0 0
    %1852 = vmatprep.subr.bf16.mxu0 0
    %1853 = vmatpush1.bf16.msra.mxu0 0
    %1854 = vmatprep.subr.bf16.mxu0 0
    %1855 = vmatpush1.bf16.msra.mxu0 0
    %1856 = vmatprep.subr.bf16.mxu0 0
    %1857 = vmatpush1.bf16.msra.mxu0 0
    %1858 = vmatprep.mubr.bf16.mxu0 0
    %1859 = vmatmul.mubr.bf16.gmra.mrb[0].mxu0 %v1824
    %v1860 = vpop.f32.mrb[0].mxu0
    %v1861 = vadd.f32 %v1422, %v1860
    %v1862 = vpop.f32.mrb[0].mxu0
    %v1863 = vpop.f32.mrb[0].mxu0
    %v1864 = vpop.f32.mrb[0].mxu0
    %1865 = vdwg.mxu0
    %1867 = vrot.lane.b32.xlu0 %v1861, 48
    %v1868 = vpop.permute.xlu0 %1867
    %v1870 = vadd.f32 %v320, %v1868
    %v1871 = vxor.u32 %v1870, 2147483648
    %v1872 = vmul.f32 %v1871, 1.442695
    %v1873 = vpow.pop %v1872
    %v1874 = vadd.f32 %v1873, 1.0
    %v1875 = vrcp.pop %v1874
    %v1876 = vmul.f32 1.0, %v1875
    %1877 = vrot.lane.b32.xlu0 %v1861, 32
    %v1878 = vpop.permute.xlu0 %1877
    %v1880 = vmul.f32 %v1876, %v1878
    %1882 = vrot.lane.b32.xlu0 %v1880, 16
    %v1883 = vpop.permute.xlu0 %1882
    %v1885 = vadd.f32 %v320, %v1883
    %v1886 = vtanh.pop %v1885
    %v1887 = vsub.f32 1.0, %v1876
    %1889 = vrot.lane.b32.xlu0 %v1886, 120
    %v1890 = vpop.permute.xlu0 %1889
    %v1892 = vmul.f32 %v1887, %v1890
    %v1894 = vrot.slane %v1817, 4
    %v1896 = vmul.f32 %v1876, %v1894
    %v1897 = vadd.f32 %v1892, %v1896
    %1899 = vrot.lane.b32.xlu0 %v1897, 72
    %v1900 = vpop.permute.xlu0 %1899
    %v1902 = vrot.slane %v1897, 2
    %1903 = vrot.lane.b32.xlu0 %v1902, 80
    %v1904 = vpop.permute.xlu0 %1903
    %v1906 = vsel %vm168, %v1900, %v1904
    %1908 = vrot.lane.b32.xlu0 %v1418, 112
    %v1909 = vpop.permute.xlu0 %1908
    %v1912 = vrot.slane %v1906, 6
    %1913 = vrot.lane.b32.xlu0 %v1912, 16
    %v1914 = vpop.permute.xlu0 %1913
    %v1916 = vsel %vm173, %v1909, %v1914
    %v1917 = vpack.c.bf16 %v1916, %v1916
    %v1918 = vlaneseq
    %v1919 = vshrl.u32 %v1918, 7
    %v1920 = vsub.s32 0, %v1919
    %v1921 = vrot.slane %v50, %v1920
    %v1923 = vrot.slane %v1917, 1
    %v1928 = vunpack.c.l.b16 %v42
    %v1929 = vunpack.c.l.b16 %v43
    %v1930 = vunpack.c.l.b16 %v44
    %v1931 = vunpack.c.l.b16 %v45
    %v1932 = vpack.c.b16 %v1929, %v1928
    %v1933 = vpack.c.b16 %v1931, %v1930
    %v1937 = vsel %vm68, %v1923, 0
    %1939 = vmatprep.subr.bf16.mxu0 0
    %1940 = vmatpush1.bf16.msra.mxu0 %v1932
    %1941 = vmatprep.subr.bf16.mxu0 0
    %1942 = vmatpush1.bf16.msra.mxu0 %v1933
    %1943 = vmatprep.subr.bf16.mxu0 0
    %1944 = vmatpush1.bf16.msra.mxu0 0
    %1945 = vmatprep.subr.bf16.mxu0 0
    %1946 = vmatpush1.bf16.msra.mxu0 0
    %1947 = vmatprep.subr.bf16.mxu0 0
    %1948 = vmatpush1.bf16.msra.mxu0 0
    %1949 = vmatprep.subr.bf16.mxu0 0
    %1950 = vmatpush1.bf16.msra.mxu0 0
    %1951 = vmatprep.subr.bf16.mxu0 0
    %1952 = vmatpush1.bf16.msra.mxu0 0
    %1953 = vmatprep.subr.bf16.mxu0 0
    %1954 = vmatpush1.bf16.msra.mxu0 0
    %1955 = vmatprep.subr.bf16.mxu0 0
    %1956 = vmatpush1.bf16.msra.mxu0 0
    %1957 = vmatprep.subr.bf16.mxu0 0
    %1958 = vmatpush1.bf16.msra.mxu0 0
    %1959 = vmatprep.subr.bf16.mxu0 0
    %1960 = vmatpush1.bf16.msra.mxu0 0
    %1961 = vmatprep.subr.bf16.mxu0 0
    %1962 = vmatpush1.bf16.msra.mxu0 0
    %1963 = vmatprep.subr.bf16.mxu0 0
    %1964 = vmatpush1.bf16.msra.mxu0 0
    %1965 = vmatprep.subr.bf16.mxu0 0
    %1966 = vmatpush1.bf16.msra.mxu0 0
    %1967 = vmatprep.subr.bf16.mxu0 0
    %1968 = vmatpush1.bf16.msra.mxu0 0
    %1969 = vmatprep.subr.bf16.mxu0 0
    %1970 = vmatpush1.bf16.msra.mxu0 0
    %1971 = vmatprep.mubr.bf16.mxu0 0
    %1972 = vmatmul.mubr.bf16.gmra.mrb[0].mxu0 %v1937
    %v1973 = vpop.f32.mrb[0].mxu0
    %v1974 = vadd.f32 %v1921, %v1973
    %v1975 = vpop.f32.mrb[0].mxu0
    %v1976 = vpop.f32.mrb[0].mxu0
    %v1977 = vpop.f32.mrb[0].mxu0
    %1978 = vdwg.mxu0
    %v1979 = vlaneseq
    %v1980 = vshrl.u32 %v1979, 7
    %v1981 = vsub.s32 0, %v1980
    %v1982 = vrot.slane %v51, %v1981
    %v1983 = vmul.f32 %v121, %v1982
    %v1984 = vadd.f32 %v1983, 0.0
    %v1985 = vlaneseq
    %v1986 = vshrl.u32 %v1985, 7
    %v1987 = vsub.s32 1, %v1986
    %v1988 = vrot.slane %v51, %v1987
    %v1989 = vmul.f32 %v121, %v1988
    %v1991 = vrot.slane %v1989, 2
    %v1993 = vadd.f32 %v1984, %v1991
    %v1994 = vlaneseq
    %v1995 = vshrl.u32 %v1994, 7
    %v1996 = vsub.s32 2, %v1995
    %v1997 = vrot.slane %v51, %v1996
    %v1998 = vmul.f32 %v121, %v1997
    %v2000 = vrot.slane %v1998, 4
    %v2002 = vadd.f32 %v1993, %v2000
    %v2003 = vlaneseq
    %v2004 = vshrl.u32 %v2003, 7
    %v2005 = vsub.s32 3, %v2004
    %v2006 = vrot.slane %v51, %v2005
    %v2007 = vmul.f32 %v121, %v2006
    %v2009 = vrot.slane %v2007, 6
    %v2011 = vadd.f32 %v2002, %v2009
    %v2012 = vadd.f32 %v1974, %v2011
    %v2013 = vxor.u32 %v2012, 2147483648
    %v2014 = vmul.f32 %v2013, 1.442695
    %v2015 = vpow.pop %v2014
    %v2016 = vadd.f32 %v2015, 1.0
    %v2017 = vrcp.pop %v2016
    %v2018 = vmul.f32 1.0, %v2017
    %vm2019 = vcmask 58368
    %2020 = vst.msk [vmem:[#allocation5] sm:$0x3] %vm2019, %v2018
    // Predicated region
    $region18: #{lstnet_forward.1} parent=1 // pred_check
      _
    $region19: #{lstnet_forward.1} parent=1 // pred_check_branch
      %2022 = sbr.rel (0) target = $region21
    $region20: #{lstnet_forward.1} parent=1 // pred_region
      %s2024 = ssub.s32 32, 32
      %2025 = vsyncadd [#allocation4], %s2024
      %s2027 = sshll.u32 [#allocation5], 4
      %s2028 = int_to_ptr.vmem [resolvable:$true] %s2027
      %2030 = dma.vmem_to_hbm [thread:$0]  %s2028, 32, %s3, [#allocation4]
    $region21: #{lstnet_forward.1} parent=1 // pred_fallthru
      _
    // Predicated region
    $region22: #{lstnet_forward.1} parent=1 // pred_check
      _
    $region23: #{lstnet_forward.1} parent=1 // pred_check_branch
      %2032 = sbr.rel (0) target = $region25
    $region24: #{lstnet_forward.1} parent=1 // pred_region
      %2033 = dma.done [#allocation4], 32
    $region25: #{lstnet_forward.1} parent=1 // pred_fallthru
      _
    %2034 = vsyncpa [#allocation3], 1
    %2035 = vsyncpa [#allocation4], 1

</llo_original>
